<compile_context>
chip_gen: v7x
topology: tpu7x:2x2x1
jax: 0.10.0
libtpu: 0.0.40
codegen_flags: <defaults>
</compile_context>

<pallas_src>
import functools

import jax
import jax.numpy as jnp
from jax.experimental import pallas as pl
from jax.experimental.pallas import tpu as pltpu

# ---- hyperparameters (stand-ins for CONFIG) --------------------------------
BLOCK_SIZE = 8      # T
N_EMBD = 32         # C
N_HEADS = 4
HEAD_SIZE = N_EMBD // N_HEADS
DROPOUT = 0.0

_NEG_BIG = -1e30    # finite stand-in for -inf in the causal mask


# ---- one-time weight packing (hoisted out of the per-call path) ------------
def pack_mha_weights(wq, wk, wv):
    """(n_heads, C, H) per-head weights -> single (C, 3*C) QKV matrix.

    Column order matches the head-concat order of the reference.  The
    C**-0.5 attention scale is folded into the Q columns so the kernel never
    multiplies by it.
    """
    n_heads, C, H = wq.shape

    def _stack(w):                                  # (n_heads, C, H) -> (C, n_heads*H)
        return jnp.transpose(w, (1, 0, 2)).reshape(C, n_heads * H)

    scale = jnp.asarray(C, jnp.float32) ** -0.5     # reference scales by C, not head_size
    return jnp.concatenate([_stack(wq) * scale, _stack(wk), _stack(wv)], axis=-1)


# ---- fused MHA kernel: QKV proj + causal attention + concat + out proj -----
def _mha_fused_kernel(x_ref, wqkv_ref, wproj_ref, bproj_ref, o_ref,
                      *, batch, seq, n_heads, head_size):
    # x_ref:     (B*T, C)   whole batch, flattened over (B, T)
    # wqkv_ref:  (C, 3*C)   [Wq*scale | Wk | Wv], heads laid out contiguously
    # wproj_ref: (C, C)
    # bproj_ref: (1, C)
    # o_ref:     (B*T, C)
    x = x_ref[...]                                  # (B*T, C)
    C = x.shape[-1]

    # One MXU push for Q, K, V across all heads and all batch rows.
    qkv = jnp.dot(x, wqkv_ref[...], preferred_element_type=jnp.float32)  # (B*T, 3C)
    q_all = qkv[:, 0 * C:1 * C]                     # (B*T, C), scale pre-folded
    k_all = qkv[:, 1 * C:2 * C]
    v_all = qkv[:, 2 * C:3 * C]

    row = jax.lax.broadcasted_iota(jnp.int32, (seq, seq), 0)
    col = jax.lax.broadcasted_iota(jnp.int32, (seq, seq), 1)
    causal = col <= row                             # tril mask, built once

    # TODO(synk): block-diagonal K/V packing would cut MXU pushes further, but
    # at C=32 / T=8 the operand-building VPU work likely eats the saving.
    out_rows = []
    for b in range(batch):                          # static unroll (B=2)
        ts = slice(b * seq, (b + 1) * seq)
        head_outs = []
        for h in range(n_heads):                    # static unroll (n_heads=4)
            hs = slice(h * head_size, (h + 1) * head_size)
            q = q_all[ts, hs]                       # (T, H)
            k = k_all[ts, hs]
            v = v_all[ts, hs]

            wei = jnp.dot(q, k.T, preferred_element_type=jnp.float32)   # (T, T)
            wei = jnp.where(causal, wei, _NEG_BIG)                      # causal mask
            wei = wei - jnp.max(wei, axis=-1, keepdims=True)
            wei = jnp.exp(wei)
            inv = pl.reciprocal(jnp.sum(wei, axis=-1, keepdims=True), approx=True)
            wei = wei * inv
            head_outs.append(jnp.dot(wei, v, preferred_element_type=jnp.float32))
        out_rows.append(jnp.concatenate(head_outs, axis=-1))            # (T, C)

    cat = jnp.concatenate(out_rows, axis=0)                             # (B*T, C)
    y = jnp.dot(cat, wproj_ref[...],
                preferred_element_type=jnp.float32) + bproj_ref[...]
    o_ref[...] = y.astype(o_ref.dtype)              # single full-block store


# ---- wrapper ----------------------------------------------------------------
def multi_head_attention(x, wqkv, w_proj, b_proj):
    """x: (B, T, C) float32, wqkv: pre-packed (C, 3C) -> (B, T, C) float32."""
    B, T, C = x.shape
    BT = B * T
    x2d = x.reshape(BT, C)

    kernel = functools.partial(
        _mha_fused_kernel,
        batch=B, seq=T, n_heads=N_HEADS, head_size=HEAD_SIZE)

    out2d = pl.pallas_call(
        kernel,
        out_shape=jax.ShapeDtypeStruct((BT, C), x.dtype),
        grid=(1,),                                   # single step: whole problem
        in_specs=[
            pl.BlockSpec((BT, C), lambda i: (0, 0)),
            pl.BlockSpec((C, 3 * C), lambda i: (0, 0)),
            pl.BlockSpec((C, C), lambda i: (0, 0)),
            pl.BlockSpec((1, C), lambda i: (0, 0)),
        ],
        out_specs=pl.BlockSpec((BT, C), lambda i: (0, 0)),
    )(x2d, wqkv, w_proj, b_proj)
    return out2d.reshape(B, T, C)


def _reference(x, wq, wk, wv, w_proj, b_proj):
    """Pure-JAX reference mirroring the PyTorch forward (eval mode)."""
    B, T, C = x.shape
    outs = []
    tril = jnp.tril(jnp.ones((T, T), dtype=bool))
    for h in range(wq.shape[0]):
        q = x @ wq[h]
        k = x @ wk[h]
        v = x @ wv[h]
        wei = (q @ jnp.swapaxes(k, -2, -1)) * (C ** -0.5)
        wei = jnp.where(tril, wei, -jnp.inf)
        wei = jax.nn.softmax(wei, axis=-1)
        outs.append(wei @ v)
    cat = jnp.concatenate(outs, axis=-1)
    return cat @ w_proj + b_proj[0]


if __name__ == "__main__":
    key = jax.random.PRNGKey(0)
    kx, kq, kk, kv, kw, kb = jax.random.split(key, 6)

    B, T, C, H = 2, BLOCK_SIZE, N_EMBD, HEAD_SIZE
    x = jax.random.normal(kx, (B, T, C), dtype=jnp.float32)

    # deterministic synthetic parameters
    wq = jax.random.normal(kq, (N_HEADS, C, H), dtype=jnp.float32) * 0.02
    wk = jax.random.normal(kk, (N_HEADS, C, H), dtype=jnp.float32) * 0.02
    wv = jax.random.normal(kv, (N_HEADS, C, H), dtype=jnp.float32) * 0.02
    w_proj = jax.random.normal(kw, (C, C), dtype=jnp.float32) * 0.02
    b_proj = jax.random.normal(kb, (1, C), dtype=jnp.float32) * 0.02

    # One-time weight packing (done outside the per-call / jitted path).
    wqkv = jax.block_until_ready(pack_mha_weights(wq, wk, wv))

    out = jax.jit(multi_head_attention)(x, wqkv, w_proj, b_proj)
    out = jax.block_until_ready(out)

    ref = _reference(x, wq, wk, wv, w_proj, b_proj)
    assert out.shape == (B, T, C), out.shape
    # Tolerance relaxed slightly: softmax denominator uses the EUP approximate
    # reciprocal (pl.reciprocal(approx=True)).
    assert jnp.allclose(out, ref, atol=1e-4, rtol=1e-4), "mismatch vs reference"

    print("KERNEL_OK")
</pallas_src>

<mosaic_0001>
module attributes {stable_mosaic.version = 11 : i64} {
  func.func @_mha_fused_kernel(%arg0: i32, %arg1: memref<16x32xf32, #tpu.memory_space<vmem>>, %arg2: memref<32x96xf32, #tpu.memory_space<vmem>>, %arg3: memref<32x32xf32, #tpu.memory_space<vmem>>, %arg4: memref<1x32xf32, #tpu.memory_space<vmem>>, %arg5: memref<16x32xf32, #tpu.memory_space<vmem>>) attributes {dimension_semantics = [#tpu.dimension_semantics<arbitrary>], iteration_bounds = array<i64: 1>, scalar_prefetch = 0 : i64, scratch_operands = 0 : i64, tpu.core_type = #tpu.core_type<tc>, window_params = [{pipeline_mode = #tpu.pipeline_mode<synchronous>, transform_indices = @transform_0, window_bounds = array<i64: 16, 32>}, {pipeline_mode = #tpu.pipeline_mode<synchronous>, transform_indices = @transform_1, window_bounds = array<i64: 32, 96>}, {pipeline_mode = #tpu.pipeline_mode<synchronous>, transform_indices = @transform_2, window_bounds = array<i64: 32, 32>}, {pipeline_mode = #tpu.pipeline_mode<synchronous>, transform_indices = @transform_3, window_bounds = array<i64: 1, 32>}, {pipeline_mode = #tpu.pipeline_mode<synchronous>, transform_indices = @transform_4, window_bounds = array<i64: 16, 32>}]} {
    %c0 = arith.constant 0 : index
    %c0_0 = arith.constant 0 : index
    %0 = vector.load %arg1[%c0, %c0_0] : memref<16x32xf32, #tpu.memory_space<vmem>>, vector<16x32xf32>
    %c0_1 = arith.constant 0 : index
    %c0_2 = arith.constant 0 : index
    %1 = vector.load %arg2[%c0_1, %c0_2] : memref<32x96xf32, #tpu.memory_space<vmem>>, vector<32x96xf32>
    %cst = arith.constant dense<0.000000e+00> : vector<16x96xf32>
    %2 = tpu.matmul %0, %1, %cst {dimension_numbers = #tpu.dot_dimension_numbers<[1], [0], [0], [1], [0, 0, 1, 1], [], []>} : vector<16x32xf32>, vector<32x96xf32>, vector<16x96xf32> -> vector<16x96xf32>
    %3 = vector.extract_strided_slice %2 {offsets = [0, 0], sizes = [16, 32], strides = [1, 1]} : vector<16x96xf32> to vector<16x32xf32>
    %4 = vector.extract_strided_slice %2 {offsets = [0, 32], sizes = [16, 32], strides = [1, 1]} : vector<16x96xf32> to vector<16x32xf32>
    %5 = vector.extract_strided_slice %2 {offsets = [0, 64], sizes = [16, 32], strides = [1, 1]} : vector<16x96xf32> to vector<16x32xf32>
    %6 = tpu.iota {dimensions = array<i32: 0>} : vector<8x8xi32>
    %7 = tpu.iota {dimensions = array<i32: 1>} : vector<8x8xi32>
    %8 = arith.cmpi sle, %7, %6 : vector<8x8xi32>
    %9 = vector.extract_strided_slice %3 {offsets = [0, 0], sizes = [8, 8], strides = [1, 1]} : vector<16x32xf32> to vector<8x8xf32>
    %10 = vector.extract_strided_slice %4 {offsets = [0, 0], sizes = [8, 8], strides = [1, 1]} : vector<16x32xf32> to vector<8x8xf32>
    %11 = vector.extract_strided_slice %5 {offsets = [0, 0], sizes = [8, 8], strides = [1, 1]} : vector<16x32xf32> to vector<8x8xf32>
    %12 = tpu.transpose %10, [1, 0] : vector<8x8xf32> -> vector<8x8xf32>
    %cst_3 = arith.constant dense<0.000000e+00> : vector<8x8xf32>
    %13 = tpu.matmul %9, %12, %cst_3 {dimension_numbers = #tpu.dot_dimension_numbers<[1], [0], [0], [1], [0, 0, 1, 1], [], []>} : vector<8x8xf32>, vector<8x8xf32>, vector<8x8xf32> -> vector<8x8xf32>
    %cst_4 = arith.constant -1.000000e+30 : f32
    %14 = vector.broadcast %cst_4 : f32 to vector<8x8xf32>
    %15 = arith.select %8, %13, %14 : vector<8x8xi1>, vector<8x8xf32>
    %cst_5 = arith.constant dense<0xFF800000> : vector<8xf32>
    %16 = vector.multi_reduction <maximumf>, %15, %cst_5 [1] : vector<8x8xf32> to vector<8xf32>
    %17 = vector.shape_cast %16 : vector<8xf32> to vector<8x1xf32>
    %18 = vector.broadcast %17 : vector<8x1xf32> to vector<8x8xf32>
    %19 = arith.subf %15, %18 : vector<8x8xf32>
    %20 = math.exp %19 : vector<8x8xf32>
    %cst_6 = arith.constant dense<0.000000e+00> : vector<8xf32>
    %21 = vector.multi_reduction <add>, %20, %cst_6 [1] : vector<8x8xf32> to vector<8xf32>
    %22 = vector.shape_cast %21 : vector<8xf32> to vector<8x1xf32>
    %23 = tpu.reciprocal %22 {approx = true} : vector<8x1xf32> -> vector<8x1xf32>
    %24 = vector.broadcast %23 : vector<8x1xf32> to vector<8x8xf32>
    %25 = arith.mulf %20, %24 : vector<8x8xf32>
    %cst_7 = arith.constant dense<0.000000e+00> : vector<8x8xf32>
    %26 = tpu.matmul %25, %11, %cst_7 {dimension_numbers = #tpu.dot_dimension_numbers<[1], [0], [0], [1], [0, 0, 1, 1], [], []>} : vector<8x8xf32>, vector<8x8xf32>, vector<8x8xf32> -> vector<8x8xf32>
    %27 = vector.extract_strided_slice %3 {offsets = [0, 8], sizes = [8, 8], strides = [1, 1]} : vector<16x32xf32> to vector<8x8xf32>
    %28 = vector.extract_strided_slice %4 {offsets = [0, 8], sizes = [8, 8], strides = [1, 1]} : vector<16x32xf32> to vector<8x8xf32>
    %29 = vector.extract_strided_slice %5 {offsets = [0, 8], sizes = [8, 8], strides = [1, 1]} : vector<16x32xf32> to vector<8x8xf32>
    %30 = tpu.transpose %28, [1, 0] : vector<8x8xf32> -> vector<8x8xf32>
    %cst_8 = arith.constant dense<0.000000e+00> : vector<8x8xf32>
    %31 = tpu.matmul %27, %30, %cst_8 {dimension_numbers = #tpu.dot_dimension_numbers<[1], [0], [0], [1], [0, 0, 1, 1], [], []>} : vector<8x8xf32>, vector<8x8xf32>, vector<8x8xf32> -> vector<8x8xf32>
    %cst_9 = arith.constant -1.000000e+30 : f32
    %32 = vector.broadcast %cst_9 : f32 to vector<8x8xf32>
    %33 = arith.select %8, %31, %32 : vector<8x8xi1>, vector<8x8xf32>
    %cst_10 = arith.constant dense<0xFF800000> : vector<8xf32>
    %34 = vector.multi_reduction <maximumf>, %33, %cst_10 [1] : vector<8x8xf32> to vector<8xf32>
    %35 = vector.shape_cast %34 : vector<8xf32> to vector<8x1xf32>
    %36 = vector.broadcast %35 : vector<8x1xf32> to vector<8x8xf32>
    %37 = arith.subf %33, %36 : vector<8x8xf32>
    %38 = math.exp %37 : vector<8x8xf32>
    %cst_11 = arith.constant dense<0.000000e+00> : vector<8xf32>
    %39 = vector.multi_reduction <add>, %38, %cst_11 [1] : vector<8x8xf32> to vector<8xf32>
    %40 = vector.shape_cast %39 : vector<8xf32> to vector<8x1xf32>
    %41 = tpu.reciprocal %40 {approx = true} : vector<8x1xf32> -> vector<8x1xf32>
    %42 = vector.broadcast %41 : vector<8x1xf32> to vector<8x8xf32>
    %43 = arith.mulf %38, %42 : vector<8x8xf32>
    %cst_12 = arith.constant dense<0.000000e+00> : vector<8x8xf32>
    %44 = tpu.matmul %43, %29, %cst_12 {dimension_numbers = #tpu.dot_dimension_numbers<[1], [0], [0], [1], [0, 0, 1, 1], [], []>} : vector<8x8xf32>, vector<8x8xf32>, vector<8x8xf32> -> vector<8x8xf32>
    %45 = vector.extract_strided_slice %3 {offsets = [0, 16], sizes = [8, 8], strides = [1, 1]} : vector<16x32xf32> to vector<8x8xf32>
    %46 = vector.extract_strided_slice %4 {offsets = [0, 16], sizes = [8, 8], strides = [1, 1]} : vector<16x32xf32> to vector<8x8xf32>
    %47 = vector.extract_strided_slice %5 {offsets = [0, 16], sizes = [8, 8], strides = [1, 1]} : vector<16x32xf32> to vector<8x8xf32>
    %48 = tpu.transpose %46, [1, 0] : vector<8x8xf32> -> vector<8x8xf32>
    %cst_13 = arith.constant dense<0.000000e+00> : vector<8x8xf32>
    %49 = tpu.matmul %45, %48, %cst_13 {dimension_numbers = #tpu.dot_dimension_numbers<[1], [0], [0], [1], [0, 0, 1, 1], [], []>} : vector<8x8xf32>, vector<8x8xf32>, vector<8x8xf32> -> vector<8x8xf32>
    %cst_14 = arith.constant -1.000000e+30 : f32
    %50 = vector.broadcast %cst_14 : f32 to vector<8x8xf32>
    %51 = arith.select %8, %49, %50 : vector<8x8xi1>, vector<8x8xf32>
    %cst_15 = arith.constant dense<0xFF800000> : vector<8xf32>
    %52 = vector.multi_reduction <maximumf>, %51, %cst_15 [1] : vector<8x8xf32> to vector<8xf32>
    %53 = vector.shape_cast %52 : vector<8xf32> to vector<8x1xf32>
    %54 = vector.broadcast %53 : vector<8x1xf32> to vector<8x8xf32>
    %55 = arith.subf %51, %54 : vector<8x8xf32>
    %56 = math.exp %55 : vector<8x8xf32>
    %cst_16 = arith.constant dense<0.000000e+00> : vector<8xf32>
    %57 = vector.multi_reduction <add>, %56, %cst_16 [1] : vector<8x8xf32> to vector<8xf32>
    %58 = vector.shape_cast %57 : vector<8xf32> to vector<8x1xf32>
    %59 = tpu.reciprocal %58 {approx = true} : vector<8x1xf32> -> vector<8x1xf32>
    %60 = vector.broadcast %59 : vector<8x1xf32> to vector<8x8xf32>
    %61 = arith.mulf %56, %60 : vector<8x8xf32>
    %cst_17 = arith.constant dense<0.000000e+00> : vector<8x8xf32>
    %62 = tpu.matmul %61, %47, %cst_17 {dimension_numbers = #tpu.dot_dimension_numbers<[1], [0], [0], [1], [0, 0, 1, 1], [], []>} : vector<8x8xf32>, vector<8x8xf32>, vector<8x8xf32> -> vector<8x8xf32>
    %63 = vector.extract_strided_slice %3 {offsets = [0, 24], sizes = [8, 8], strides = [1, 1]} : vector<16x32xf32> to vector<8x8xf32>
    %64 = vector.extract_strided_slice %4 {offsets = [0, 24], sizes = [8, 8], strides = [1, 1]} : vector<16x32xf32> to vector<8x8xf32>
    %65 = vector.extract_strided_slice %5 {offsets = [0, 24], sizes = [8, 8], strides = [1, 1]} : vector<16x32xf32> to vector<8x8xf32>
    %66 = tpu.transpose %64, [1, 0] : vector<8x8xf32> -> vector<8x8xf32>
    %cst_18 = arith.constant dense<0.000000e+00> : vector<8x8xf32>
    %67 = tpu.matmul %63, %66, %cst_18 {dimension_numbers = #tpu.dot_dimension_numbers<[1], [0], [0], [1], [0, 0, 1, 1], [], []>} : vector<8x8xf32>, vector<8x8xf32>, vector<8x8xf32> -> vector<8x8xf32>
    %cst_19 = arith.constant -1.000000e+30 : f32
    %68 = vector.broadcast %cst_19 : f32 to vector<8x8xf32>
    %69 = arith.select %8, %67, %68 : vector<8x8xi1>, vector<8x8xf32>
    %cst_20 = arith.constant dense<0xFF800000> : vector<8xf32>
    %70 = vector.multi_reduction <maximumf>, %69, %cst_20 [1] : vector<8x8xf32> to vector<8xf32>
    %71 = vector.shape_cast %70 : vector<8xf32> to vector<8x1xf32>
    %72 = vector.broadcast %71 : vector<8x1xf32> to vector<8x8xf32>
    %73 = arith.subf %69, %72 : vector<8x8xf32>
    %74 = math.exp %73 : vector<8x8xf32>
    %cst_21 = arith.constant dense<0.000000e+00> : vector<8xf32>
    %75 = vector.multi_reduction <add>, %74, %cst_21 [1] : vector<8x8xf32> to vector<8xf32>
    %76 = vector.shape_cast %75 : vector<8xf32> to vector<8x1xf32>
    %77 = tpu.reciprocal %76 {approx = true} : vector<8x1xf32> -> vector<8x1xf32>
    %78 = vector.broadcast %77 : vector<8x1xf32> to vector<8x8xf32>
    %79 = arith.mulf %74, %78 : vector<8x8xf32>
    %cst_22 = arith.constant dense<0.000000e+00> : vector<8x8xf32>
    %80 = tpu.matmul %79, %65, %cst_22 {dimension_numbers = #tpu.dot_dimension_numbers<[1], [0], [0], [1], [0, 0, 1, 1], [], []>} : vector<8x8xf32>, vector<8x8xf32>, vector<8x8xf32> -> vector<8x8xf32>
    %81 = tpu.concatenate %26, %44, %62, %80 in 1 : vector<8x8xf32>, vector<8x8xf32>, vector<8x8xf32>, vector<8x8xf32> -> vector<8x32xf32>
    %82 = vector.extract_strided_slice %3 {offsets = [8, 0], sizes = [8, 8], strides = [1, 1]} : vector<16x32xf32> to vector<8x8xf32>
    %83 = vector.extract_strided_slice %4 {offsets = [8, 0], sizes = [8, 8], strides = [1, 1]} : vector<16x32xf32> to vector<8x8xf32>
    %84 = vector.extract_strided_slice %5 {offsets = [8, 0], sizes = [8, 8], strides = [1, 1]} : vector<16x32xf32> to vector<8x8xf32>
    %85 = tpu.transpose %83, [1, 0] : vector<8x8xf32> -> vector<8x8xf32>
    %cst_23 = arith.constant dense<0.000000e+00> : vector<8x8xf32>
    %86 = tpu.matmul %82, %85, %cst_23 {dimension_numbers = #tpu.dot_dimension_numbers<[1], [0], [0], [1], [0, 0, 1, 1], [], []>} : vector<8x8xf32>, vector<8x8xf32>, vector<8x8xf32> -> vector<8x8xf32>
    %cst_24 = arith.constant -1.000000e+30 : f32
    %87 = vector.broadcast %cst_24 : f32 to vector<8x8xf32>
    %88 = arith.select %8, %86, %87 : vector<8x8xi1>, vector<8x8xf32>
    %cst_25 = arith.constant dense<0xFF800000> : vector<8xf32>
    %89 = vector.multi_reduction <maximumf>, %88, %cst_25 [1] : vector<8x8xf32> to vector<8xf32>
    %90 = vector.shape_cast %89 : vector<8xf32> to vector<8x1xf32>
    %91 = vector.broadcast %90 : vector<8x1xf32> to vector<8x8xf32>
    %92 = arith.subf %88, %91 : vector<8x8xf32>
    %93 = math.exp %92 : vector<8x8xf32>
    %cst_26 = arith.constant dense<0.000000e+00> : vector<8xf32>
    %94 = vector.multi_reduction <add>, %93, %cst_26 [1] : vector<8x8xf32> to vector<8xf32>
    %95 = vector.shape_cast %94 : vector<8xf32> to vector<8x1xf32>
    %96 = tpu.reciprocal %95 {approx = true} : vector<8x1xf32> -> vector<8x1xf32>
    %97 = vector.broadcast %96 : vector<8x1xf32> to vector<8x8xf32>
    %98 = arith.mulf %93, %97 : vector<8x8xf32>
    %cst_27 = arith.constant dense<0.000000e+00> : vector<8x8xf32>
    %99 = tpu.matmul %98, %84, %cst_27 {dimension_numbers = #tpu.dot_dimension_numbers<[1], [0], [0], [1], [0, 0, 1, 1], [], []>} : vector<8x8xf32>, vector<8x8xf32>, vector<8x8xf32> -> vector<8x8xf32>
    %100 = vector.extract_strided_slice %3 {offsets = [8, 8], sizes = [8, 8], strides = [1, 1]} : vector<16x32xf32> to vector<8x8xf32>
    %101 = vector.extract_strided_slice %4 {offsets = [8, 8], sizes = [8, 8], strides = [1, 1]} : vector<16x32xf32> to vector<8x8xf32>
    %102 = vector.extract_strided_slice %5 {offsets = [8, 8], sizes = [8, 8], strides = [1, 1]} : vector<16x32xf32> to vector<8x8xf32>
    %103 = tpu.transpose %101, [1, 0] : vector<8x8xf32> -> vector<8x8xf32>
    %cst_28 = arith.constant dense<0.000000e+00> : vector<8x8xf32>
    %104 = tpu.matmul %100, %103, %cst_28 {dimension_numbers = #tpu.dot_dimension_numbers<[1], [0], [0], [1], [0, 0, 1, 1], [], []>} : vector<8x8xf32>, vector<8x8xf32>, vector<8x8xf32> -> vector<8x8xf32>
    %cst_29 = arith.constant -1.000000e+30 : f32
    %105 = vector.broadcast %cst_29 : f32 to vector<8x8xf32>
    %106 = arith.select %8, %104, %105 : vector<8x8xi1>, vector<8x8xf32>
    %cst_30 = arith.constant dense<0xFF800000> : vector<8xf32>
    %107 = vector.multi_reduction <maximumf>, %106, %cst_30 [1] : vector<8x8xf32> to vector<8xf32>
    %108 = vector.shape_cast %107 : vector<8xf32> to vector<8x1xf32>
    %109 = vector.broadcast %108 : vector<8x1xf32> to vector<8x8xf32>
    %110 = arith.subf %106, %109 : vector<8x8xf32>
    %111 = math.exp %110 : vector<8x8xf32>
    %cst_31 = arith.constant dense<0.000000e+00> : vector<8xf32>
    %112 = vector.multi_reduction <add>, %111, %cst_31 [1] : vector<8x8xf32> to vector<8xf32>
    %113 = vector.shape_cast %112 : vector<8xf32> to vector<8x1xf32>
    %114 = tpu.reciprocal %113 {approx = true} : vector<8x1xf32> -> vector<8x1xf32>
    %115 = vector.broadcast %114 : vector<8x1xf32> to vector<8x8xf32>
    %116 = arith.mulf %111, %115 : vector<8x8xf32>
    %cst_32 = arith.constant dense<0.000000e+00> : vector<8x8xf32>
    %117 = tpu.matmul %116, %102, %cst_32 {dimension_numbers = #tpu.dot_dimension_numbers<[1], [0], [0], [1], [0, 0, 1, 1], [], []>} : vector<8x8xf32>, vector<8x8xf32>, vector<8x8xf32> -> vector<8x8xf32>
    %118 = vector.extract_strided_slice %3 {offsets = [8, 16], sizes = [8, 8], strides = [1, 1]} : vector<16x32xf32> to vector<8x8xf32>
    %119 = vector.extract_strided_slice %4 {offsets = [8, 16], sizes = [8, 8], strides = [1, 1]} : vector<16x32xf32> to vector<8x8xf32>
    %120 = vector.extract_strided_slice %5 {offsets = [8, 16], sizes = [8, 8], strides = [1, 1]} : vector<16x32xf32> to vector<8x8xf32>
    %121 = tpu.transpose %119, [1, 0] : vector<8x8xf32> -> vector<8x8xf32>
    %cst_33 = arith.constant dense<0.000000e+00> : vector<8x8xf32>
    %122 = tpu.matmul %118, %121, %cst_33 {dimension_numbers = #tpu.dot_dimension_numbers<[1], [0], [0], [1], [0, 0, 1, 1], [], []>} : vector<8x8xf32>, vector<8x8xf32>, vector<8x8xf32> -> vector<8x8xf32>
    %cst_34 = arith.constant -1.000000e+30 : f32
    %123 = vector.broadcast %cst_34 : f32 to vector<8x8xf32>
    %124 = arith.select %8, %122, %123 : vector<8x8xi1>, vector<8x8xf32>
    %cst_35 = arith.constant dense<0xFF800000> : vector<8xf32>
    %125 = vector.multi_reduction <maximumf>, %124, %cst_35 [1] : vector<8x8xf32> to vector<8xf32>
    %126 = vector.shape_cast %125 : vector<8xf32> to vector<8x1xf32>
    %127 = vector.broadcast %126 : vector<8x1xf32> to vector<8x8xf32>
    %128 = arith.subf %124, %127 : vector<8x8xf32>
    %129 = math.exp %128 : vector<8x8xf32>
    %cst_36 = arith.constant dense<0.000000e+00> : vector<8xf32>
    %130 = vector.multi_reduction <add>, %129, %cst_36 [1] : vector<8x8xf32> to vector<8xf32>
    %131 = vector.shape_cast %130 : vector<8xf32> to vector<8x1xf32>
    %132 = tpu.reciprocal %131 {approx = true} : vector<8x1xf32> -> vector<8x1xf32>
    %133 = vector.broadcast %132 : vector<8x1xf32> to vector<8x8xf32>
    %134 = arith.mulf %129, %133 : vector<8x8xf32>
    %cst_37 = arith.constant dense<0.000000e+00> : vector<8x8xf32>
    %135 = tpu.matmul %134, %120, %cst_37 {dimension_numbers = #tpu.dot_dimension_numbers<[1], [0], [0], [1], [0, 0, 1, 1], [], []>} : vector<8x8xf32>, vector<8x8xf32>, vector<8x8xf32> -> vector<8x8xf32>
    %136 = vector.extract_strided_slice %3 {offsets = [8, 24], sizes = [8, 8], strides = [1, 1]} : vector<16x32xf32> to vector<8x8xf32>
    %137 = vector.extract_strided_slice %4 {offsets = [8, 24], sizes = [8, 8], strides = [1, 1]} : vector<16x32xf32> to vector<8x8xf32>
    %138 = vector.extract_strided_slice %5 {offsets = [8, 24], sizes = [8, 8], strides = [1, 1]} : vector<16x32xf32> to vector<8x8xf32>
    %139 = tpu.transpose %137, [1, 0] : vector<8x8xf32> -> vector<8x8xf32>
    %cst_38 = arith.constant dense<0.000000e+00> : vector<8x8xf32>
    %140 = tpu.matmul %136, %139, %cst_38 {dimension_numbers = #tpu.dot_dimension_numbers<[1], [0], [0], [1], [0, 0, 1, 1], [], []>} : vector<8x8xf32>, vector<8x8xf32>, vector<8x8xf32> -> vector<8x8xf32>
    %cst_39 = arith.constant -1.000000e+30 : f32
    %141 = vector.broadcast %cst_39 : f32 to vector<8x8xf32>
    %142 = arith.select %8, %140, %141 : vector<8x8xi1>, vector<8x8xf32>
    %cst_40 = arith.constant dense<0xFF800000> : vector<8xf32>
    %143 = vector.multi_reduction <maximumf>, %142, %cst_40 [1] : vector<8x8xf32> to vector<8xf32>
    %144 = vector.shape_cast %143 : vector<8xf32> to vector<8x1xf32>
    %145 = vector.broadcast %144 : vector<8x1xf32> to vector<8x8xf32>
    %146 = arith.subf %142, %145 : vector<8x8xf32>
    %147 = math.exp %146 : vector<8x8xf32>
    %cst_41 = arith.constant dense<0.000000e+00> : vector<8xf32>
    %148 = vector.multi_reduction <add>, %147, %cst_41 [1] : vector<8x8xf32> to vector<8xf32>
    %149 = vector.shape_cast %148 : vector<8xf32> to vector<8x1xf32>
    %150 = tpu.reciprocal %149 {approx = true} : vector<8x1xf32> -> vector<8x1xf32>
    %151 = vector.broadcast %150 : vector<8x1xf32> to vector<8x8xf32>
    %152 = arith.mulf %147, %151 : vector<8x8xf32>
    %cst_42 = arith.constant dense<0.000000e+00> : vector<8x8xf32>
    %153 = tpu.matmul %152, %138, %cst_42 {dimension_numbers = #tpu.dot_dimension_numbers<[1], [0], [0], [1], [0, 0, 1, 1], [], []>} : vector<8x8xf32>, vector<8x8xf32>, vector<8x8xf32> -> vector<8x8xf32>
    %154 = tpu.concatenate %99, %117, %135, %153 in 1 : vector<8x8xf32>, vector<8x8xf32>, vector<8x8xf32>, vector<8x8xf32> -> vector<8x32xf32>
    %155 = tpu.concatenate %81, %154 in 0 : vector<8x32xf32>, vector<8x32xf32> -> vector<16x32xf32>
    %c0_43 = arith.constant 0 : index
    %c0_44 = arith.constant 0 : index
    %156 = vector.load %arg3[%c0_43, %c0_44] : memref<32x32xf32, #tpu.memory_space<vmem>>, vector<32x32xf32>
    %cst_45 = arith.constant dense<0.000000e+00> : vector<16x32xf32>
    %157 = tpu.matmul %155, %156, %cst_45 {dimension_numbers = #tpu.dot_dimension_numbers<[1], [0], [0], [1], [0, 0, 1, 1], [], []>} : vector<16x32xf32>, vector<32x32xf32>, vector<16x32xf32> -> vector<16x32xf32>
    %c0_46 = arith.constant 0 : index
    %c0_47 = arith.constant 0 : index
    %158 = vector.load %arg4[%c0_46, %c0_47] : memref<1x32xf32, #tpu.memory_space<vmem>>, vector<1x32xf32>
    %159 = vector.broadcast %158 : vector<1x32xf32> to vector<16x32xf32>
    %160 = arith.addf %157, %159 : vector<16x32xf32>
    %c0_48 = arith.constant 0 : index
    %c0_49 = arith.constant 0 : index
    %161 = vector.load %arg5[%c0_48, %c0_49] : memref<16x32xf32, #tpu.memory_space<vmem>>, vector<16x32xf32>
    tpu.vector_store %arg5[%c0_48, %c0_49], %160 {strides = array<i32>} : memref<16x32xf32, #tpu.memory_space<vmem>>, vector<16x32xf32>,
    return
  }
  func.func @transform_0(%arg0: i32) -> (i32, i32) {
    %c0_i32 = arith.constant 0 : i32
    %c0_i32_0 = arith.constant 0 : i32
    %c0_i32_1 = arith.constant 0 : i32
    return %c0_i32, %c0_i32_0 : i32, i32
  }
  func.func @transform_1(%arg0: i32) -> (i32, i32) {
    %c0_i32 = arith.constant 0 : i32
    %c0_i32_0 = arith.constant 0 : i32
    %c0_i32_1 = arith.constant 0 : i32
    return %c0_i32, %c0_i32_0 : i32, i32
  }
  func.func @transform_2(%arg0: i32) -> (i32, i32) {
    %c0_i32 = arith.constant 0 : i32
    %c0_i32_0 = arith.constant 0 : i32
    %c0_i32_1 = arith.constant 0 : i32
    return %c0_i32, %c0_i32_0 : i32, i32
  }
  func.func @transform_3(%arg0: i32) -> (i32, i32) {
    %c0_i32 = arith.constant 0 : i32
    %c0_i32_0 = arith.constant 0 : i32
    %c0_i32_1 = arith.constant 0 : i32
    return %c0_i32, %c0_i32_0 : i32, i32
  }
  func.func @transform_4(%arg0: i32) -> (i32, i32) {
    %c0_i32 = arith.constant 0 : i32
    %c0_i32_0 = arith.constant 0 : i32
    %c0_i32_1 = arith.constant 0 : i32
    return %c0_i32, %c0_i32_0 : i32, i32
  }
}

</mosaic_0001>

<llo_original>
// kernel: multi_head_attention.1
$region0: #{multi_head_attention.1}
  #allocation0 [shape = 'u32[]', space=smem, size = 0x4, offset = 0x4, fixed_abs, tag = 'smem constant byte address 0x4 - core index']
  #allocation1 [shape = 'u32[144,128]{1,0:T(1,128)}', space=vmem, size = 0x12000, scoped, tag = 'internal scratch']
  %s0 = inlined_call_operand.hbm [shape: f32[16,32], index: 0, kind: input, shape index: {}]
  %s1 = inlined_call_operand.hbm [shape: f32[32,96], index: 1, kind: input, shape index: {}]
  %s2 = inlined_call_operand.hbm [shape: f32[32,32], index: 2, kind: input, shape index: {}]
  %s3 = inlined_call_operand.vmem [shape: f32[1,32], index: 3, kind: input, shape index: {}]
  %s4 = inlined_call_operand.hbm [shape: f32[16,32], index: 4, kind: output, shape index: {}]
  %s5 = sld [smem:[#allocation0]]
  $region38: #{multi_head_attention.1} parent=0
    _
  %s7 = ssub.s32 1, %s5
  %s8 = scalar_select 0, %s7, %s5
  $region1: #{multi_head_attention.1} parent=0
    #allocation2 [shape = 'u8[8192]{0}', space=vmem, size = 0x2000, scoped, tag = 'input window, operand 0, single buffered']
    #allocation3 [shape = 's32[1]{0}', space=sflag, size = 0x4, scoped, tag = 'scoped memory for multi_head_attention.1']
    #allocation4 [shape = 's32[1]{0}', space=sflag, size = 0x4, scoped, tag = 'scoped memory for multi_head_attention.1']
    #allocation5 [shape = 'u8[16384]{0}', space=vmem, size = 0x4000, scoped, tag = 'input window, operand 1, single buffered']
    #allocation6 [shape = 's32[1]{0}', space=sflag, size = 0x4, scoped, tag = 'scoped memory for multi_head_attention.1']
    #allocation7 [shape = 'u8[16384]{0}', space=vmem, size = 0x4000, scoped, tag = 'input window, operand 2, single buffered']
    #allocation8 [shape = 'u8[8192]{0}', space=vmem, size = 0x2000, scoped, tag = 'output window, operand 0, single buffered']
    %9 = vsyncpa [#allocation3], 0
    %10 = vsyncpa [#allocation6], 0
    %11 = vsyncpa [#allocation4], 0
    // Predicated region
    $region2: #{multi_head_attention.1} parent=1 // pred_check
      _
    $region3: #{multi_head_attention.1} parent=1 // pred_check_branch
      %13 = sbr.rel (0) target = $region5
    $region4: #{multi_head_attention.1} parent=1 // pred_region
      %s15 = ssub.s32 256, 256
      %16 = vsyncadd [#allocation3], %s15
      %s17 = sshll.u32 [#allocation2], 4
      %s18 = int_to_ptr.vmem [resolvable:$true] %s17
      %23 = dma.hbm_to_vmem [thread:$0]  %s0, 256, %s18, [#allocation3], 128, 128, 8
    $region5: #{multi_head_attention.1} parent=1 // pred_fallthru
      _
    // Predicated region
    $region6: #{multi_head_attention.1} parent=1 // pred_check
      _
    $region7: #{multi_head_attention.1} parent=1 // pred_check_branch
      %25 = sbr.rel (0) target = $region9
    $region8: #{multi_head_attention.1} parent=1 // pred_region
      %s27 = ssub.s32 512, 512
      %28 = vsyncadd [#allocation6], %s27
      %s29 = sshll.u32 [#allocation5], 4
      %s30 = int_to_ptr.vmem [resolvable:$true] %s29
      %35 = dma.hbm_to_vmem [thread:$0]  %s1, 512, %s30, [#allocation6], 128, 128, 8
    $region9: #{multi_head_attention.1} parent=1 // pred_fallthru
      _
    // Predicated region
    $region10: #{multi_head_attention.1} parent=1 // pred_check
      _
    $region11: #{multi_head_attention.1} parent=1 // pred_check_branch
      %37 = sbr.rel (0) target = $region13
    $region12: #{multi_head_attention.1} parent=1 // pred_region
      %s39 = ssub.s32 512, 512
      %40 = vsyncadd [#allocation6], %s39
      %s41 = sshll.u32 [#allocation7], 4
      %s42 = int_to_ptr.vmem [resolvable:$true] %s41
      %47 = dma.hbm_to_vmem [thread:$0]  %s2, 512, %s42, [#allocation6], 128, 128, 8
    $region13: #{multi_head_attention.1} parent=1 // pred_fallthru
      _
    // Predicated region
    $region14: #{multi_head_attention.1} parent=1 // pred_check
      _
    $region15: #{multi_head_attention.1} parent=1 // pred_check_branch
      %49 = sbr.rel (0) target = $region17
    $region16: #{multi_head_attention.1} parent=1 // pred_region
      _
    $region17: #{multi_head_attention.1} parent=1 // pred_fallthru
      _
    // Predicated region
    $region18: #{multi_head_attention.1} parent=1 // pred_check
      _
    $region19: #{multi_head_attention.1} parent=1 // pred_check_branch
      %51 = sbr.rel (0) target = $region21
    $region20: #{multi_head_attention.1} parent=1 // pred_region
      %52 = dma.done [#allocation3], 256
    $region21: #{multi_head_attention.1} parent=1 // pred_fallthru
      _
    // Predicated region
    $region22: #{multi_head_attention.1} parent=1 // pred_check
      _
    $region23: #{multi_head_attention.1} parent=1 // pred_check_branch
      %54 = sbr.rel (0) target = $region25
    $region24: #{multi_head_attention.1} parent=1 // pred_region
      %55 = dma.done [#allocation6], 512
    $region25: #{multi_head_attention.1} parent=1 // pred_fallthru
      _
    // Predicated region
    $region26: #{multi_head_attention.1} parent=1 // pred_check
      _
    $region27: #{multi_head_attention.1} parent=1 // pred_check_branch
      %57 = sbr.rel (0) target = $region29
    $region28: #{multi_head_attention.1} parent=1 // pred_region
      %58 = dma.done [#allocation6], 512
    $region29: #{multi_head_attention.1} parent=1 // pred_fallthru
      _
    %v59 = vld [vmem:[#allocation2] sm:$0xff]
    %v60 = vld [vmem:[#allocation2 + $0x8] sm:$0xff]
    %v61 = vld [vmem:[#allocation5] sm:$0xff]
    %v62 = vld [vmem:[#allocation5 + $0x8] sm:$0xff]
    %v63 = vld [vmem:[#allocation5 + $0x10] sm:$0xff]
    %v64 = vld [vmem:[#allocation5 + $0x18] sm:$0xff]
    %vm65 = vcmask 261120
    %v67 = vsel %vm65, %v59, 0
    %v70 = vsel %vm65, %v60, 0
    %72 = vmatprep.subr.mxu0 0.0
    %73 = vmatpush1.msra.mxu0 %v61
    %74 = vmatprep.subr.mxu0 0.0
    %75 = vmatpush1.msra.mxu0 %v62
    %76 = vmatprep.subr.mxu0 0.0
    %77 = vmatpush1.msra.mxu0 %v63
    %78 = vmatprep.subr.mxu0 0.0
    %79 = vmatpush1.msra.mxu0 %v64
    %80 = vmatprep.subr.mxu0 0.0
    %81 = vmatpush1.msra.mxu0 0.0
    %82 = vmatprep.subr.mxu0 0.0
    %83 = vmatpush1.msra.mxu0 0.0
    %84 = vmatprep.subr.mxu0 0.0
    %85 = vmatpush1.msra.mxu0 0.0
    %86 = vmatprep.subr.mxu0 0.0
    %87 = vmatpush1.msra.mxu0 0.0
    %88 = vmatprep.subr.mxu0 0.0
    %89 = vmatpush1.msra.mxu0 0.0
    %90 = vmatprep.subr.mxu0 0.0
    %91 = vmatpush1.msra.mxu0 0.0
    %92 = vmatprep.subr.mxu0 0.0
    %93 = vmatpush1.msra.mxu0 0.0
    %94 = vmatprep.subr.mxu0 0.0
    %95 = vmatpush1.msra.mxu0 0.0
    %96 = vmatprep.subr.mxu0 0.0
    %97 = vmatpush1.msra.mxu0 0.0
    %98 = vmatprep.subr.mxu0 0.0
    %99 = vmatpush1.msra.mxu0 0.0
    %100 = vmatprep.subr.mxu0 0.0
    %101 = vmatpush1.msra.mxu0 0.0
    %102 = vmatprep.subr.mxu0 0.0
    %103 = vmatpush1.msra.mxu0 0.0
    %104 = vmatprep.subr.mxu0 0.0
    %105 = vmatpush1.msra.mxu0 0.0
    %106 = vmatprep.subr.mxu0 0.0
    %107 = vmatpush1.msra.mxu0 0.0
    %108 = vmatprep.subr.mxu0 0.0
    %109 = vmatpush1.msra.mxu0 0.0
    %110 = vmatprep.subr.mxu0 0.0
    %111 = vmatpush1.msra.mxu0 0.0
    %112 = vmatprep.subr.mxu0 0.0
    %113 = vmatpush1.msra.mxu0 0.0
    %114 = vmatprep.subr.mxu0 0.0
    %115 = vmatpush1.msra.mxu0 0.0
    %116 = vmatprep.subr.mxu0 0.0
    %117 = vmatpush1.msra.mxu0 0.0
    %118 = vmatprep.subr.mxu0 0.0
    %119 = vmatpush1.msra.mxu0 0.0
    %120 = vmatprep.subr.mxu0 0.0
    %121 = vmatpush1.msra.mxu0 0.0
    %122 = vmatprep.subr.mxu0 0.0
    %123 = vmatpush1.msra.mxu0 0.0
    %124 = vmatprep.subr.mxu0 0.0
    %125 = vmatpush1.msra.mxu0 0.0
    %126 = vmatprep.subr.mxu0 0.0
    %127 = vmatpush1.msra.mxu0 0.0
    %128 = vmatprep.subr.mxu0 0.0
    %129 = vmatpush1.msra.mxu0 0.0
    %130 = vmatprep.subr.mxu0 0.0
    %131 = vmatpush1.msra.mxu0 0.0
    %132 = vmatprep.subr.mxu0 0.0
    %133 = vmatpush1.msra.mxu0 0.0
    %134 = vmatprep.subr.mxu0 0.0
    %135 = vmatpush1.msra.mxu0 0.0
    %136 = vmatprep.mubr.f32.mxu0 0.0
    %137 = vmatmul.mubr.f32.gmra.mrb[0].mxu0 %v67
    %v138 = vpop.f32.mrb[0].mxu0
    %v139 = vadd.f32 0.0, %v138
    %v140 = vpop.f32.mrb[0].mxu0
    %141 = vmatprep.mubr.f32.mxu0 0.0
    %142 = vmatmul.mubr.f32.gmra.mrb[0].mxu0 %v70
    %v143 = vpop.f32.mrb[0].mxu0
    %v144 = vadd.f32 0.0, %v143
    %v145 = vpop.f32.mrb[0].mxu0
    %146 = vdwg.mxu0
    %v147 = vlaneseq
    %v148 = vshrl.u32 %v147, 7
    %v149 = vlaneseq
    %v150 = vand.u32 %v149, 127
    %vm151 = vcmp.le.s32.totalorder %v150, %v148
    %153 = vrot.lane.b32.xlu0 %v139, 96
    %v154 = vpop.permute.xlu0 %153
    %vm155 = vcmask 64512
    %v156 = vsel %vm155, %v139, 0
    %v158 = vsel %vm155, %v154, 0
    %160 = vmatprep.subr.mxu0 0.0
    %161 = vmatpush1.xpose.msra.mxu0 %v158
    %162 = vmatprep.subr.mxu0 0.0
    %163 = vmatpush1.xpose.msra.mxu0 0.0
    %164 = vmatprep.subr.mxu0 0.0
    %165 = vmatpush1.xpose.msra.mxu0 0.0
    %166 = vmatprep.subr.mxu0 0.0
    %167 = vmatpush1.xpose.msra.mxu0 0.0
    %168 = vmatprep.subr.mxu0 0.0
    %169 = vmatpush1.xpose.msra.mxu0 0.0
    %170 = vmatprep.subr.mxu0 0.0
    %171 = vmatpush1.xpose.msra.mxu0 0.0
    %172 = vmatprep.subr.mxu0 0.0
    %173 = vmatpush1.xpose.msra.mxu0 0.0
    %174 = vmatprep.subr.mxu0 0.0
    %175 = vmatpush1.xpose.msra.mxu0 0.0
    %176 = vmatprep.subr.mxu0 0.0
    %177 = vmatpush1.xpose.msra.mxu0 0.0
    %178 = vmatprep.subr.mxu0 0.0
    %179 = vmatpush1.xpose.msra.mxu0 0.0
    %180 = vmatprep.subr.mxu0 0.0
    %181 = vmatpush1.xpose.msra.mxu0 0.0
    %182 = vmatprep.subr.mxu0 0.0
    %183 = vmatpush1.xpose.msra.mxu0 0.0
    %184 = vmatprep.subr.mxu0 0.0
    %185 = vmatpush1.xpose.msra.mxu0 0.0
    %186 = vmatprep.subr.mxu0 0.0
    %187 = vmatpush1.xpose.msra.mxu0 0.0
    %188 = vmatprep.subr.mxu0 0.0
    %189 = vmatpush1.xpose.msra.mxu0 0.0
    %190 = vmatprep.subr.mxu0 0.0
    %191 = vmatpush1.xpose.msra.mxu0 0.0
    %192 = vmatprep.subr.mxu0 0.0
    %193 = vmatpush1.xpose.msra.mxu0 0.0
    %194 = vmatprep.subr.mxu0 0.0
    %195 = vmatpush1.xpose.msra.mxu0 0.0
    %196 = vmatprep.subr.mxu0 0.0
    %197 = vmatpush1.xpose.msra.mxu0 0.0
    %198 = vmatprep.subr.mxu0 0.0
    %199 = vmatpush1.xpose.msra.mxu0 0.0
    %200 = vmatprep.subr.mxu0 0.0
    %201 = vmatpush1.xpose.msra.mxu0 0.0
    %202 = vmatprep.subr.mxu0 0.0
    %203 = vmatpush1.xpose.msra.mxu0 0.0
    %204 = vmatprep.subr.mxu0 0.0
    %205 = vmatpush1.xpose.msra.mxu0 0.0
    %206 = vmatprep.subr.mxu0 0.0
    %207 = vmatpush1.xpose.msra.mxu0 0.0
    %208 = vmatprep.subr.mxu0 0.0
    %209 = vmatpush1.xpose.msra.mxu0 0.0
    %210 = vmatprep.subr.mxu0 0.0
    %211 = vmatpush1.xpose.msra.mxu0 0.0
    %212 = vmatprep.subr.mxu0 0.0
    %213 = vmatpush1.xpose.msra.mxu0 0.0
    %214 = vmatprep.subr.mxu0 0.0
    %215 = vmatpush1.xpose.msra.mxu0 0.0
    %216 = vmatprep.subr.mxu0 0.0
    %217 = vmatpush1.xpose.msra.mxu0 0.0
    %218 = vmatprep.subr.mxu0 0.0
    %219 = vmatpush1.xpose.msra.mxu0 0.0
    %220 = vmatprep.subr.mxu0 0.0
    %221 = vmatpush1.xpose.msra.mxu0 0.0
    %222 = vmatprep.subr.mxu0 0.0
    %223 = vmatpush1.xpose.msra.mxu0 0.0
    %224 = vmatprep.mubr.f32.mxu0 0.0
    %225 = vmatmul.mubr.f32.gmra.mrb[0].mxu0 %v156
    %v226 = vpop.f32.mrb[0].mxu0
    %v227 = vadd.f32 0.0, %v226
    %v228 = vpop.f32.mrb[0].mxu0
    %229 = vdwg.mxu0
    %v230 = vsel %vm151, %v227, -1e+30
    %v231 = vsel %vm155, %v230, -inf
    %232 = vmax.xlane.f32.xlu0 %v231
    %v233 = vpop.xlane.xlu0 %232
    %v234 = vsub.f32 %v230, %v233
    %v235 = vmul.f32 %v234, 1.442695
    %v236 = vpow.pop %v235
    %v237 = vsel %vm155, %v236, 0.0
    %238 = vadd.xlane.f32.xlu0 %v237
    %v239 = vpop.xlane.xlu0 %238
    %v240 = vrcp.pop %v239
    %v241 = vmul.f32 %v236, %v240
    %242 = vrot.lane.b32.xlu0 %v139, 64
    %v243 = vpop.permute.xlu0 %242
    %v246 = vsel %vm155, %v241, 0
    %248 = vmatprep.subr.mxu0 0.0
    %249 = vmatpush1.msra.mxu0 %v243
    %250 = vmatprep.subr.mxu0 0.0
    %251 = vmatpush1.msra.mxu0 0.0
    %252 = vmatprep.subr.mxu0 0.0
    %253 = vmatpush1.msra.mxu0 0.0
    %254 = vmatprep.subr.mxu0 0.0
    %255 = vmatpush1.msra.mxu0 0.0
    %256 = vmatprep.subr.mxu0 0.0
    %257 = vmatpush1.msra.mxu0 0.0
    %258 = vmatprep.subr.mxu0 0.0
    %259 = vmatpush1.msra.mxu0 0.0
    %260 = vmatprep.subr.mxu0 0.0
    %261 = vmatpush1.msra.mxu0 0.0
    %262 = vmatprep.subr.mxu0 0.0
    %263 = vmatpush1.msra.mxu0 0.0
    %264 = vmatprep.subr.mxu0 0.0
    %265 = vmatpush1.msra.mxu0 0.0
    %266 = vmatprep.subr.mxu0 0.0
    %267 = vmatpush1.msra.mxu0 0.0
    %268 = vmatprep.subr.mxu0 0.0
    %269 = vmatpush1.msra.mxu0 0.0
    %270 = vmatprep.subr.mxu0 0.0
    %271 = vmatpush1.msra.mxu0 0.0
    %272 = vmatprep.subr.mxu0 0.0
    %273 = vmatpush1.msra.mxu0 0.0
    %274 = vmatprep.subr.mxu0 0.0
    %275 = vmatpush1.msra.mxu0 0.0
    %276 = vmatprep.subr.mxu0 0.0
    %277 = vmatpush1.msra.mxu0 0.0
    %278 = vmatprep.subr.mxu0 0.0
    %279 = vmatpush1.msra.mxu0 0.0
    %280 = vmatprep.subr.mxu0 0.0
    %281 = vmatpush1.msra.mxu0 0.0
    %282 = vmatprep.subr.mxu0 0.0
    %283 = vmatpush1.msra.mxu0 0.0
    %284 = vmatprep.subr.mxu0 0.0
    %285 = vmatpush1.msra.mxu0 0.0
    %286 = vmatprep.subr.mxu0 0.0
    %287 = vmatpush1.msra.mxu0 0.0
    %288 = vmatprep.subr.mxu0 0.0
    %289 = vmatpush1.msra.mxu0 0.0
    %290 = vmatprep.subr.mxu0 0.0
    %291 = vmatpush1.msra.mxu0 0.0
    %292 = vmatprep.subr.mxu0 0.0
    %293 = vmatpush1.msra.mxu0 0.0
    %294 = vmatprep.subr.mxu0 0.0
    %295 = vmatpush1.msra.mxu0 0.0
    %296 = vmatprep.subr.mxu0 0.0
    %297 = vmatpush1.msra.mxu0 0.0
    %298 = vmatprep.subr.mxu0 0.0
    %299 = vmatpush1.msra.mxu0 0.0
    %300 = vmatprep.subr.mxu0 0.0
    %301 = vmatpush1.msra.mxu0 0.0
    %302 = vmatprep.subr.mxu0 0.0
    %303 = vmatpush1.msra.mxu0 0.0
    %304 = vmatprep.subr.mxu0 0.0
    %305 = vmatpush1.msra.mxu0 0.0
    %306 = vmatprep.subr.mxu0 0.0
    %307 = vmatpush1.msra.mxu0 0.0
    %308 = vmatprep.subr.mxu0 0.0
    %309 = vmatpush1.msra.mxu0 0.0
    %310 = vmatprep.subr.mxu0 0.0
    %311 = vmatpush1.msra.mxu0 0.0
    %312 = vmatprep.mubr.f32.mxu0 0.0
    %313 = vmatmul.mubr.f32.gmra.mrb[0].mxu0 %v246
    %v314 = vpop.f32.mrb[0].mxu0
    %v315 = vadd.f32 0.0, %v314
    %v316 = vpop.f32.mrb[0].mxu0
    %317 = vdwg.mxu0
    %318 = vrot.lane.b32.xlu0 %v139, 120
    %v319 = vpop.permute.xlu0 %318
    %320 = vrot.lane.b32.xlu0 %v139, 88
    %v321 = vpop.permute.xlu0 %320
    %v322 = vsel %vm155, %v319, 0
    %v324 = vsel %vm155, %v321, 0
    %326 = vmatprep.subr.mxu0 0.0
    %327 = vmatpush1.xpose.msra.mxu0 %v324
    %328 = vmatprep.subr.mxu0 0.0
    %329 = vmatpush1.xpose.msra.mxu0 0.0
    %330 = vmatprep.subr.mxu0 0.0
    %331 = vmatpush1.xpose.msra.mxu0 0.0
    %332 = vmatprep.subr.mxu0 0.0
    %333 = vmatpush1.xpose.msra.mxu0 0.0
    %334 = vmatprep.subr.mxu0 0.0
    %335 = vmatpush1.xpose.msra.mxu0 0.0
    %336 = vmatprep.subr.mxu0 0.0
    %337 = vmatpush1.xpose.msra.mxu0 0.0
    %338 = vmatprep.subr.mxu0 0.0
    %339 = vmatpush1.xpose.msra.mxu0 0.0
    %340 = vmatprep.subr.mxu0 0.0
    %341 = vmatpush1.xpose.msra.mxu0 0.0
    %342 = vmatprep.subr.mxu0 0.0
    %343 = vmatpush1.xpose.msra.mxu0 0.0
    %344 = vmatprep.subr.mxu0 0.0
    %345 = vmatpush1.xpose.msra.mxu0 0.0
    %346 = vmatprep.subr.mxu0 0.0
    %347 = vmatpush1.xpose.msra.mxu0 0.0
    %348 = vmatprep.subr.mxu0 0.0
    %349 = vmatpush1.xpose.msra.mxu0 0.0
    %350 = vmatprep.subr.mxu0 0.0
    %351 = vmatpush1.xpose.msra.mxu0 0.0
    %352 = vmatprep.subr.mxu0 0.0
    %353 = vmatpush1.xpose.msra.mxu0 0.0
    %354 = vmatprep.subr.mxu0 0.0
    %355 = vmatpush1.xpose.msra.mxu0 0.0
    %356 = vmatprep.subr.mxu0 0.0
    %357 = vmatpush1.xpose.msra.mxu0 0.0
    %358 = vmatprep.subr.mxu0 0.0
    %359 = vmatpush1.xpose.msra.mxu0 0.0
    %360 = vmatprep.subr.mxu0 0.0
    %361 = vmatpush1.xpose.msra.mxu0 0.0
    %362 = vmatprep.subr.mxu0 0.0
    %363 = vmatpush1.xpose.msra.mxu0 0.0
    %364 = vmatprep.subr.mxu0 0.0
    %365 = vmatpush1.xpose.msra.mxu0 0.0
    %366 = vmatprep.subr.mxu0 0.0
    %367 = vmatpush1.xpose.msra.mxu0 0.0
    %368 = vmatprep.subr.mxu0 0.0
    %369 = vmatpush1.xpose.msra.mxu0 0.0
    %370 = vmatprep.subr.mxu0 0.0
    %371 = vmatpush1.xpose.msra.mxu0 0.0
    %372 = vmatprep.subr.mxu0 0.0
    %373 = vmatpush1.xpose.msra.mxu0 0.0
    %374 = vmatprep.subr.mxu0 0.0
    %375 = vmatpush1.xpose.msra.mxu0 0.0
    %376 = vmatprep.subr.mxu0 0.0
    %377 = vmatpush1.xpose.msra.mxu0 0.0
    %378 = vmatprep.subr.mxu0 0.0
    %379 = vmatpush1.xpose.msra.mxu0 0.0
    %380 = vmatprep.subr.mxu0 0.0
    %381 = vmatpush1.xpose.msra.mxu0 0.0
    %382 = vmatprep.subr.mxu0 0.0
    %383 = vmatpush1.xpose.msra.mxu0 0.0
    %384 = vmatprep.subr.mxu0 0.0
    %385 = vmatpush1.xpose.msra.mxu0 0.0
    %386 = vmatprep.subr.mxu0 0.0
    %387 = vmatpush1.xpose.msra.mxu0 0.0
    %388 = vmatprep.subr.mxu0 0.0
    %389 = vmatpush1.xpose.msra.mxu0 0.0
    %390 = vmatprep.mubr.f32.mxu0 0.0
    %391 = vmatmul.mubr.f32.gmra.mrb[0].mxu0 %v322
    %v392 = vpop.f32.mrb[0].mxu0
    %v393 = vadd.f32 0.0, %v392
    %v394 = vpop.f32.mrb[0].mxu0
    %395 = vdwg.mxu0
    %v396 = vsel %vm151, %v393, -1e+30
    %v397 = vsel %vm155, %v396, -inf
    %398 = vmax.xlane.f32.xlu0 %v397
    %v399 = vpop.xlane.xlu0 %398
    %v400 = vsub.f32 %v396, %v399
    %v401 = vmul.f32 %v400, 1.442695
    %v402 = vpow.pop %v401
    %v403 = vsel %vm155, %v402, 0.0
    %404 = vadd.xlane.f32.xlu0 %v403
    %v405 = vpop.xlane.xlu0 %404
    %v406 = vrcp.pop %v405
    %v407 = vmul.f32 %v402, %v406
    %408 = vrot.lane.b32.xlu0 %v139, 56
    %v409 = vpop.permute.xlu0 %408
    %v412 = vsel %vm155, %v407, 0
    %414 = vmatprep.subr.mxu0 0.0
    %415 = vmatpush1.msra.mxu0 %v409
    %416 = vmatprep.subr.mxu0 0.0
    %417 = vmatpush1.msra.mxu0 0.0
    %418 = vmatprep.subr.mxu0 0.0
    %419 = vmatpush1.msra.mxu0 0.0
    %420 = vmatprep.subr.mxu0 0.0
    %421 = vmatpush1.msra.mxu0 0.0
    %422 = vmatprep.subr.mxu0 0.0
    %423 = vmatpush1.msra.mxu0 0.0
    %424 = vmatprep.subr.mxu0 0.0
    %425 = vmatpush1.msra.mxu0 0.0
    %426 = vmatprep.subr.mxu0 0.0
    %427 = vmatpush1.msra.mxu0 0.0
    %428 = vmatprep.subr.mxu0 0.0
    %429 = vmatpush1.msra.mxu0 0.0
    %430 = vmatprep.subr.mxu0 0.0
    %431 = vmatpush1.msra.mxu0 0.0
    %432 = vmatprep.subr.mxu0 0.0
    %433 = vmatpush1.msra.mxu0 0.0
    %434 = vmatprep.subr.mxu0 0.0
    %435 = vmatpush1.msra.mxu0 0.0
    %436 = vmatprep.subr.mxu0 0.0
    %437 = vmatpush1.msra.mxu0 0.0
    %438 = vmatprep.subr.mxu0 0.0
    %439 = vmatpush1.msra.mxu0 0.0
    %440 = vmatprep.subr.mxu0 0.0
    %441 = vmatpush1.msra.mxu0 0.0
    %442 = vmatprep.subr.mxu0 0.0
    %443 = vmatpush1.msra.mxu0 0.0
    %444 = vmatprep.subr.mxu0 0.0
    %445 = vmatpush1.msra.mxu0 0.0
    %446 = vmatprep.subr.mxu0 0.0
    %447 = vmatpush1.msra.mxu0 0.0
    %448 = vmatprep.subr.mxu0 0.0
    %449 = vmatpush1.msra.mxu0 0.0
    %450 = vmatprep.subr.mxu0 0.0
    %451 = vmatpush1.msra.mxu0 0.0
    %452 = vmatprep.subr.mxu0 0.0
    %453 = vmatpush1.msra.mxu0 0.0
    %454 = vmatprep.subr.mxu0 0.0
    %455 = vmatpush1.msra.mxu0 0.0
    %456 = vmatprep.subr.mxu0 0.0
    %457 = vmatpush1.msra.mxu0 0.0
    %458 = vmatprep.subr.mxu0 0.0
    %459 = vmatpush1.msra.mxu0 0.0
    %460 = vmatprep.subr.mxu0 0.0
    %461 = vmatpush1.msra.mxu0 0.0
    %462 = vmatprep.subr.mxu0 0.0
    %463 = vmatpush1.msra.mxu0 0.0
    %464 = vmatprep.subr.mxu0 0.0
    %465 = vmatpush1.msra.mxu0 0.0
    %466 = vmatprep.subr.mxu0 0.0
    %467 = vmatpush1.msra.mxu0 0.0
    %468 = vmatprep.subr.mxu0 0.0
    %469 = vmatpush1.msra.mxu0 0.0
    %470 = vmatprep.subr.mxu0 0.0
    %471 = vmatpush1.msra.mxu0 0.0
    %472 = vmatprep.subr.mxu0 0.0
    %473 = vmatpush1.msra.mxu0 0.0
    %474 = vmatprep.subr.mxu0 0.0
    %475 = vmatpush1.msra.mxu0 0.0
    %476 = vmatprep.subr.mxu0 0.0
    %477 = vmatpush1.msra.mxu0 0.0
    %478 = vmatprep.mubr.f32.mxu0 0.0
    %479 = vmatmul.mubr.f32.gmra.mrb[0].mxu0 %v412
    %v480 = vpop.f32.mrb[0].mxu0
    %v481 = vadd.f32 0.0, %v480
    %v482 = vpop.f32.mrb[0].mxu0
    %483 = vdwg.mxu0
    %484 = vrot.lane.b32.xlu0 %v139, 112
    %v485 = vpop.permute.xlu0 %484
    %486 = vrot.lane.b32.xlu0 %v139, 80
    %v487 = vpop.permute.xlu0 %486
    %v488 = vsel %vm155, %v485, 0
    %v490 = vsel %vm155, %v487, 0
    %492 = vmatprep.subr.mxu0 0.0
    %493 = vmatpush1.xpose.msra.mxu0 %v490
    %494 = vmatprep.subr.mxu0 0.0
    %495 = vmatpush1.xpose.msra.mxu0 0.0
    %496 = vmatprep.subr.mxu0 0.0
    %497 = vmatpush1.xpose.msra.mxu0 0.0
    %498 = vmatprep.subr.mxu0 0.0
    %499 = vmatpush1.xpose.msra.mxu0 0.0
    %500 = vmatprep.subr.mxu0 0.0
    %501 = vmatpush1.xpose.msra.mxu0 0.0
    %502 = vmatprep.subr.mxu0 0.0
    %503 = vmatpush1.xpose.msra.mxu0 0.0
    %504 = vmatprep.subr.mxu0 0.0
    %505 = vmatpush1.xpose.msra.mxu0 0.0
    %506 = vmatprep.subr.mxu0 0.0
    %507 = vmatpush1.xpose.msra.mxu0 0.0
    %508 = vmatprep.subr.mxu0 0.0
    %509 = vmatpush1.xpose.msra.mxu0 0.0
    %510 = vmatprep.subr.mxu0 0.0
    %511 = vmatpush1.xpose.msra.mxu0 0.0
    %512 = vmatprep.subr.mxu0 0.0
    %513 = vmatpush1.xpose.msra.mxu0 0.0
    %514 = vmatprep.subr.mxu0 0.0
    %515 = vmatpush1.xpose.msra.mxu0 0.0
    %516 = vmatprep.subr.mxu0 0.0
    %517 = vmatpush1.xpose.msra.mxu0 0.0
    %518 = vmatprep.subr.mxu0 0.0
    %519 = vmatpush1.xpose.msra.mxu0 0.0
    %520 = vmatprep.subr.mxu0 0.0
    %521 = vmatpush1.xpose.msra.mxu0 0.0
    %522 = vmatprep.subr.mxu0 0.0
    %523 = vmatpush1.xpose.msra.mxu0 0.0
    %524 = vmatprep.subr.mxu0 0.0
    %525 = vmatpush1.xpose.msra.mxu0 0.0
    %526 = vmatprep.subr.mxu0 0.0
    %527 = vmatpush1.xpose.msra.mxu0 0.0
    %528 = vmatprep.subr.mxu0 0.0
    %529 = vmatpush1.xpose.msra.mxu0 0.0
    %530 = vmatprep.subr.mxu0 0.0
    %531 = vmatpush1.xpose.msra.mxu0 0.0
    %532 = vmatprep.subr.mxu0 0.0
    %533 = vmatpush1.xpose.msra.mxu0 0.0
    %534 = vmatprep.subr.mxu0 0.0
    %535 = vmatpush1.xpose.msra.mxu0 0.0
    %536 = vmatprep.subr.mxu0 0.0
    %537 = vmatpush1.xpose.msra.mxu0 0.0
    %538 = vmatprep.subr.mxu0 0.0
    %539 = vmatpush1.xpose.msra.mxu0 0.0
    %540 = vmatprep.subr.mxu0 0.0
    %541 = vmatpush1.xpose.msra.mxu0 0.0
    %542 = vmatprep.subr.mxu0 0.0
    %543 = vmatpush1.xpose.msra.mxu0 0.0
    %544 = vmatprep.subr.mxu0 0.0
    %545 = vmatpush1.xpose.msra.mxu0 0.0
    %546 = vmatprep.subr.mxu0 0.0
    %547 = vmatpush1.xpose.msra.mxu0 0.0
    %548 = vmatprep.subr.mxu0 0.0
    %549 = vmatpush1.xpose.msra.mxu0 0.0
    %550 = vmatprep.subr.mxu0 0.0
    %551 = vmatpush1.xpose.msra.mxu0 0.0
    %552 = vmatprep.subr.mxu0 0.0
    %553 = vmatpush1.xpose.msra.mxu0 0.0
    %554 = vmatprep.subr.mxu0 0.0
    %555 = vmatpush1.xpose.msra.mxu0 0.0
    %556 = vmatprep.mubr.f32.mxu0 0.0
    %557 = vmatmul.mubr.f32.gmra.mrb[0].mxu0 %v488
    %v558 = vpop.f32.mrb[0].mxu0
    %v559 = vadd.f32 0.0, %v558
    %v560 = vpop.f32.mrb[0].mxu0
    %561 = vdwg.mxu0
    %v562 = vsel %vm151, %v559, -1e+30
    %v563 = vsel %vm155, %v562, -inf
    %564 = vmax.xlane.f32.xlu0 %v563
    %v565 = vpop.xlane.xlu0 %564
    %v566 = vsub.f32 %v562, %v565
    %v567 = vmul.f32 %v566, 1.442695
    %v568 = vpow.pop %v567
    %v569 = vsel %vm155, %v568, 0.0
    %570 = vadd.xlane.f32.xlu0 %v569
    %v571 = vpop.xlane.xlu0 %570
    %v572 = vrcp.pop %v571
    %v573 = vmul.f32 %v568, %v572
    %574 = vrot.lane.b32.xlu0 %v139, 48
    %v575 = vpop.permute.xlu0 %574
    %v578 = vsel %vm155, %v573, 0
    %580 = vmatprep.subr.mxu0 0.0
    %581 = vmatpush1.msra.mxu0 %v575
    %582 = vmatprep.subr.mxu0 0.0
    %583 = vmatpush1.msra.mxu0 0.0
    %584 = vmatprep.subr.mxu0 0.0
    %585 = vmatpush1.msra.mxu0 0.0
    %586 = vmatprep.subr.mxu0 0.0
    %587 = vmatpush1.msra.mxu0 0.0
    %588 = vmatprep.subr.mxu0 0.0
    %589 = vmatpush1.msra.mxu0 0.0
    %590 = vmatprep.subr.mxu0 0.0
    %591 = vmatpush1.msra.mxu0 0.0
    %592 = vmatprep.subr.mxu0 0.0
    %593 = vmatpush1.msra.mxu0 0.0
    %594 = vmatprep.subr.mxu0 0.0
    %595 = vmatpush1.msra.mxu0 0.0
    %596 = vmatprep.subr.mxu0 0.0
    %597 = vmatpush1.msra.mxu0 0.0
    %598 = vmatprep.subr.mxu0 0.0
    %599 = vmatpush1.msra.mxu0 0.0
    %600 = vmatprep.subr.mxu0 0.0
    %601 = vmatpush1.msra.mxu0 0.0
    %602 = vmatprep.subr.mxu0 0.0
    %603 = vmatpush1.msra.mxu0 0.0
    %604 = vmatprep.subr.mxu0 0.0
    %605 = vmatpush1.msra.mxu0 0.0
    %606 = vmatprep.subr.mxu0 0.0
    %607 = vmatpush1.msra.mxu0 0.0
    %608 = vmatprep.subr.mxu0 0.0
    %609 = vmatpush1.msra.mxu0 0.0
    %610 = vmatprep.subr.mxu0 0.0
    %611 = vmatpush1.msra.mxu0 0.0
    %612 = vmatprep.subr.mxu0 0.0
    %613 = vmatpush1.msra.mxu0 0.0
    %614 = vmatprep.subr.mxu0 0.0
    %615 = vmatpush1.msra.mxu0 0.0
    %616 = vmatprep.subr.mxu0 0.0
    %617 = vmatpush1.msra.mxu0 0.0
    %618 = vmatprep.subr.mxu0 0.0
    %619 = vmatpush1.msra.mxu0 0.0
    %620 = vmatprep.subr.mxu0 0.0
    %621 = vmatpush1.msra.mxu0 0.0
    %622 = vmatprep.subr.mxu0 0.0
    %623 = vmatpush1.msra.mxu0 0.0
    %624 = vmatprep.subr.mxu0 0.0
    %625 = vmatpush1.msra.mxu0 0.0
    %626 = vmatprep.subr.mxu0 0.0
    %627 = vmatpush1.msra.mxu0 0.0
    %628 = vmatprep.subr.mxu0 0.0
    %629 = vmatpush1.msra.mxu0 0.0
    %630 = vmatprep.subr.mxu0 0.0
    %631 = vmatpush1.msra.mxu0 0.0
    %632 = vmatprep.subr.mxu0 0.0
    %633 = vmatpush1.msra.mxu0 0.0
    %634 = vmatprep.subr.mxu0 0.0
    %635 = vmatpush1.msra.mxu0 0.0
    %636 = vmatprep.subr.mxu0 0.0
    %637 = vmatpush1.msra.mxu0 0.0
    %638 = vmatprep.subr.mxu0 0.0
    %639 = vmatpush1.msra.mxu0 0.0
    %640 = vmatprep.subr.mxu0 0.0
    %641 = vmatpush1.msra.mxu0 0.0
    %642 = vmatprep.subr.mxu0 0.0
    %643 = vmatpush1.msra.mxu0 0.0
    %644 = vmatprep.mubr.f32.mxu0 0.0
    %645 = vmatmul.mubr.f32.gmra.mrb[0].mxu0 %v578
    %v646 = vpop.f32.mrb[0].mxu0
    %v647 = vadd.f32 0.0, %v646
    %v648 = vpop.f32.mrb[0].mxu0
    %649 = vdwg.mxu0
    %650 = vrot.lane.b32.xlu0 %v139, 104
    %v651 = vpop.permute.xlu0 %650
    %652 = vrot.lane.b32.xlu0 %v139, 72
    %v653 = vpop.permute.xlu0 %652
    %v654 = vsel %vm155, %v651, 0
    %v656 = vsel %vm155, %v653, 0
    %658 = vmatprep.subr.mxu0 0.0
    %659 = vmatpush1.xpose.msra.mxu0 %v656
    %660 = vmatprep.subr.mxu0 0.0
    %661 = vmatpush1.xpose.msra.mxu0 0.0
    %662 = vmatprep.subr.mxu0 0.0
    %663 = vmatpush1.xpose.msra.mxu0 0.0
    %664 = vmatprep.subr.mxu0 0.0
    %665 = vmatpush1.xpose.msra.mxu0 0.0
    %666 = vmatprep.subr.mxu0 0.0
    %667 = vmatpush1.xpose.msra.mxu0 0.0
    %668 = vmatprep.subr.mxu0 0.0
    %669 = vmatpush1.xpose.msra.mxu0 0.0
    %670 = vmatprep.subr.mxu0 0.0
    %671 = vmatpush1.xpose.msra.mxu0 0.0
    %672 = vmatprep.subr.mxu0 0.0
    %673 = vmatpush1.xpose.msra.mxu0 0.0
    %674 = vmatprep.subr.mxu0 0.0
    %675 = vmatpush1.xpose.msra.mxu0 0.0
    %676 = vmatprep.subr.mxu0 0.0
    %677 = vmatpush1.xpose.msra.mxu0 0.0
    %678 = vmatprep.subr.mxu0 0.0
    %679 = vmatpush1.xpose.msra.mxu0 0.0
    %680 = vmatprep.subr.mxu0 0.0
    %681 = vmatpush1.xpose.msra.mxu0 0.0
    %682 = vmatprep.subr.mxu0 0.0
    %683 = vmatpush1.xpose.msra.mxu0 0.0
    %684 = vmatprep.subr.mxu0 0.0
    %685 = vmatpush1.xpose.msra.mxu0 0.0
    %686 = vmatprep.subr.mxu0 0.0
    %687 = vmatpush1.xpose.msra.mxu0 0.0
    %688 = vmatprep.subr.mxu0 0.0
    %689 = vmatpush1.xpose.msra.mxu0 0.0
    %690 = vmatprep.subr.mxu0 0.0
    %691 = vmatpush1.xpose.msra.mxu0 0.0
    %692 = vmatprep.subr.mxu0 0.0
    %693 = vmatpush1.xpose.msra.mxu0 0.0
    %694 = vmatprep.subr.mxu0 0.0
    %695 = vmatpush1.xpose.msra.mxu0 0.0
    %696 = vmatprep.subr.mxu0 0.0
    %697 = vmatpush1.xpose.msra.mxu0 0.0
    %698 = vmatprep.subr.mxu0 0.0
    %699 = vmatpush1.xpose.msra.mxu0 0.0
    %700 = vmatprep.subr.mxu0 0.0
    %701 = vmatpush1.xpose.msra.mxu0 0.0
    %702 = vmatprep.subr.mxu0 0.0
    %703 = vmatpush1.xpose.msra.mxu0 0.0
    %704 = vmatprep.subr.mxu0 0.0
    %705 = vmatpush1.xpose.msra.mxu0 0.0
    %706 = vmatprep.subr.mxu0 0.0
    %707 = vmatpush1.xpose.msra.mxu0 0.0
    %708 = vmatprep.subr.mxu0 0.0
    %709 = vmatpush1.xpose.msra.mxu0 0.0
    %710 = vmatprep.subr.mxu0 0.0
    %711 = vmatpush1.xpose.msra.mxu0 0.0
    %712 = vmatprep.subr.mxu0 0.0
    %713 = vmatpush1.xpose.msra.mxu0 0.0
    %714 = vmatprep.subr.mxu0 0.0
    %715 = vmatpush1.xpose.msra.mxu0 0.0
    %716 = vmatprep.subr.mxu0 0.0
    %717 = vmatpush1.xpose.msra.mxu0 0.0
    %718 = vmatprep.subr.mxu0 0.0
    %719 = vmatpush1.xpose.msra.mxu0 0.0
    %720 = vmatprep.subr.mxu0 0.0
    %721 = vmatpush1.xpose.msra.mxu0 0.0
    %722 = vmatprep.mubr.f32.mxu0 0.0
    %723 = vmatmul.mubr.f32.gmra.mrb[0].mxu0 %v654
    %v724 = vpop.f32.mrb[0].mxu0
    %v725 = vadd.f32 0.0, %v724
    %v726 = vpop.f32.mrb[0].mxu0
    %727 = vdwg.mxu0
    %v728 = vsel %vm151, %v725, -1e+30
    %v729 = vsel %vm155, %v728, -inf
    %730 = vmax.xlane.f32.xlu0 %v729
    %v731 = vpop.xlane.xlu0 %730
    %v732 = vsub.f32 %v728, %v731
    %v733 = vmul.f32 %v732, 1.442695
    %v734 = vpow.pop %v733
    %v735 = vsel %vm155, %v734, 0.0
    %736 = vadd.xlane.f32.xlu0 %v735
    %v737 = vpop.xlane.xlu0 %736
    %v738 = vrcp.pop %v737
    %v739 = vmul.f32 %v734, %v738
    %740 = vrot.lane.b32.xlu0 %v139, 40
    %v741 = vpop.permute.xlu0 %740
    %v744 = vsel %vm155, %v739, 0
    %746 = vmatprep.subr.mxu0 0.0
    %747 = vmatpush1.msra.mxu0 %v741
    %748 = vmatprep.subr.mxu0 0.0
    %749 = vmatpush1.msra.mxu0 0.0
    %750 = vmatprep.subr.mxu0 0.0
    %751 = vmatpush1.msra.mxu0 0.0
    %752 = vmatprep.subr.mxu0 0.0
    %753 = vmatpush1.msra.mxu0 0.0
    %754 = vmatprep.subr.mxu0 0.0
    %755 = vmatpush1.msra.mxu0 0.0
    %756 = vmatprep.subr.mxu0 0.0
    %757 = vmatpush1.msra.mxu0 0.0
    %758 = vmatprep.subr.mxu0 0.0
    %759 = vmatpush1.msra.mxu0 0.0
    %760 = vmatprep.subr.mxu0 0.0
    %761 = vmatpush1.msra.mxu0 0.0
    %762 = vmatprep.subr.mxu0 0.0
    %763 = vmatpush1.msra.mxu0 0.0
    %764 = vmatprep.subr.mxu0 0.0
    %765 = vmatpush1.msra.mxu0 0.0
    %766 = vmatprep.subr.mxu0 0.0
    %767 = vmatpush1.msra.mxu0 0.0
    %768 = vmatprep.subr.mxu0 0.0
    %769 = vmatpush1.msra.mxu0 0.0
    %770 = vmatprep.subr.mxu0 0.0
    %771 = vmatpush1.msra.mxu0 0.0
    %772 = vmatprep.subr.mxu0 0.0
    %773 = vmatpush1.msra.mxu0 0.0
    %774 = vmatprep.subr.mxu0 0.0
    %775 = vmatpush1.msra.mxu0 0.0
    %776 = vmatprep.subr.mxu0 0.0
    %777 = vmatpush1.msra.mxu0 0.0
    %778 = vmatprep.subr.mxu0 0.0
    %779 = vmatpush1.msra.mxu0 0.0
    %780 = vmatprep.subr.mxu0 0.0
    %781 = vmatpush1.msra.mxu0 0.0
    %782 = vmatprep.subr.mxu0 0.0
    %783 = vmatpush1.msra.mxu0 0.0
    %784 = vmatprep.subr.mxu0 0.0
    %785 = vmatpush1.msra.mxu0 0.0
    %786 = vmatprep.subr.mxu0 0.0
    %787 = vmatpush1.msra.mxu0 0.0
    %788 = vmatprep.subr.mxu0 0.0
    %789 = vmatpush1.msra.mxu0 0.0
    %790 = vmatprep.subr.mxu0 0.0
    %791 = vmatpush1.msra.mxu0 0.0
    %792 = vmatprep.subr.mxu0 0.0
    %793 = vmatpush1.msra.mxu0 0.0
    %794 = vmatprep.subr.mxu0 0.0
    %795 = vmatpush1.msra.mxu0 0.0
    %796 = vmatprep.subr.mxu0 0.0
    %797 = vmatpush1.msra.mxu0 0.0
    %798 = vmatprep.subr.mxu0 0.0
    %799 = vmatpush1.msra.mxu0 0.0
    %800 = vmatprep.subr.mxu0 0.0
    %801 = vmatpush1.msra.mxu0 0.0
    %802 = vmatprep.subr.mxu0 0.0
    %803 = vmatpush1.msra.mxu0 0.0
    %804 = vmatprep.subr.mxu0 0.0
    %805 = vmatpush1.msra.mxu0 0.0
    %806 = vmatprep.subr.mxu0 0.0
    %807 = vmatpush1.msra.mxu0 0.0
    %808 = vmatprep.subr.mxu0 0.0
    %809 = vmatpush1.msra.mxu0 0.0
    %810 = vmatprep.mubr.f32.mxu0 0.0
    %811 = vmatmul.mubr.f32.gmra.mrb[0].mxu0 %v744
    %v812 = vpop.f32.mrb[0].mxu0
    %v813 = vadd.f32 0.0, %v812
    %v814 = vpop.f32.mrb[0].mxu0
    %815 = vdwg.mxu0
    %817 = vrot.lane.b32.xlu0 %v481, 8
    %v818 = vpop.permute.xlu0 %817
    %821 = vrot.lane.b32.xlu0 %v647, 16
    %v822 = vpop.permute.xlu0 %821
    %825 = vrot.lane.b32.xlu0 %v813, 24
    %v826 = vpop.permute.xlu0 %825
    %v828 = vsel %vm155, %v315, %v818
    %vm829 = vcmask 130048
    %v830 = vsel %vm829, %v828, %v822
    %vm831 = vcmask 195584
    %v832 = vsel %vm831, %v830, %v826
    %834 = vrot.lane.b32.xlu0 %v144, 96
    %v835 = vpop.permute.xlu0 %834
    %v836 = vsel %vm155, %v144, 0
    %v838 = vsel %vm155, %v835, 0
    %840 = vmatprep.subr.mxu0 0.0
    %841 = vmatpush1.xpose.msra.mxu0 %v838
    %842 = vmatprep.subr.mxu0 0.0
    %843 = vmatpush1.xpose.msra.mxu0 0.0
    %844 = vmatprep.subr.mxu0 0.0
    %845 = vmatpush1.xpose.msra.mxu0 0.0
    %846 = vmatprep.subr.mxu0 0.0
    %847 = vmatpush1.xpose.msra.mxu0 0.0
    %848 = vmatprep.subr.mxu0 0.0
    %849 = vmatpush1.xpose.msra.mxu0 0.0
    %850 = vmatprep.subr.mxu0 0.0
    %851 = vmatpush1.xpose.msra.mxu0 0.0
    %852 = vmatprep.subr.mxu0 0.0
    %853 = vmatpush1.xpose.msra.mxu0 0.0
    %854 = vmatprep.subr.mxu0 0.0
    %855 = vmatpush1.xpose.msra.mxu0 0.0
    %856 = vmatprep.subr.mxu0 0.0
    %857 = vmatpush1.xpose.msra.mxu0 0.0
    %858 = vmatprep.subr.mxu0 0.0
    %859 = vmatpush1.xpose.msra.mxu0 0.0
    %860 = vmatprep.subr.mxu0 0.0
    %861 = vmatpush1.xpose.msra.mxu0 0.0
    %862 = vmatprep.subr.mxu0 0.0
    %863 = vmatpush1.xpose.msra.mxu0 0.0
    %864 = vmatprep.subr.mxu0 0.0
    %865 = vmatpush1.xpose.msra.mxu0 0.0
    %866 = vmatprep.subr.mxu0 0.0
    %867 = vmatpush1.xpose.msra.mxu0 0.0
    %868 = vmatprep.subr.mxu0 0.0
    %869 = vmatpush1.xpose.msra.mxu0 0.0
    %870 = vmatprep.subr.mxu0 0.0
    %871 = vmatpush1.xpose.msra.mxu0 0.0
    %872 = vmatprep.subr.mxu0 0.0
    %873 = vmatpush1.xpose.msra.mxu0 0.0
    %874 = vmatprep.subr.mxu0 0.0
    %875 = vmatpush1.xpose.msra.mxu0 0.0
    %876 = vmatprep.subr.mxu0 0.0
    %877 = vmatpush1.xpose.msra.mxu0 0.0
    %878 = vmatprep.subr.mxu0 0.0
    %879 = vmatpush1.xpose.msra.mxu0 0.0
    %880 = vmatprep.subr.mxu0 0.0
    %881 = vmatpush1.xpose.msra.mxu0 0.0
    %882 = vmatprep.subr.mxu0 0.0
    %883 = vmatpush1.xpose.msra.mxu0 0.0
    %884 = vmatprep.subr.mxu0 0.0
    %885 = vmatpush1.xpose.msra.mxu0 0.0
    %886 = vmatprep.subr.mxu0 0.0
    %887 = vmatpush1.xpose.msra.mxu0 0.0
    %888 = vmatprep.subr.mxu0 0.0
    %889 = vmatpush1.xpose.msra.mxu0 0.0
    %890 = vmatprep.subr.mxu0 0.0
    %891 = vmatpush1.xpose.msra.mxu0 0.0
    %892 = vmatprep.subr.mxu0 0.0
    %893 = vmatpush1.xpose.msra.mxu0 0.0
    %894 = vmatprep.subr.mxu0 0.0
    %895 = vmatpush1.xpose.msra.mxu0 0.0
    %896 = vmatprep.subr.mxu0 0.0
    %897 = vmatpush1.xpose.msra.mxu0 0.0
    %898 = vmatprep.subr.mxu0 0.0
    %899 = vmatpush1.xpose.msra.mxu0 0.0
    %900 = vmatprep.subr.mxu0 0.0
    %901 = vmatpush1.xpose.msra.mxu0 0.0
    %902 = vmatprep.subr.mxu0 0.0
    %903 = vmatpush1.xpose.msra.mxu0 0.0
    %904 = vmatprep.mubr.f32.mxu0 0.0
    %905 = vmatmul.mubr.f32.gmra.mrb[0].mxu0 %v836
    %v906 = vpop.f32.mrb[0].mxu0
    %v907 = vadd.f32 0.0, %v906
    %v908 = vpop.f32.mrb[0].mxu0
    %909 = vdwg.mxu0
    %v910 = vsel %vm151, %v907, -1e+30
    %v911 = vsel %vm155, %v910, -inf
    %912 = vmax.xlane.f32.xlu0 %v911
    %v913 = vpop.xlane.xlu0 %912
    %v914 = vsub.f32 %v910, %v913
    %v915 = vmul.f32 %v914, 1.442695
    %v916 = vpow.pop %v915
    %v917 = vsel %vm155, %v916, 0.0
    %918 = vadd.xlane.f32.xlu0 %v917
    %v919 = vpop.xlane.xlu0 %918
    %v920 = vrcp.pop %v919
    %v921 = vmul.f32 %v916, %v920
    %922 = vrot.lane.b32.xlu0 %v144, 64
    %v923 = vpop.permute.xlu0 %922
    %v926 = vsel %vm155, %v921, 0
    %928 = vmatprep.subr.mxu0 0.0
    %929 = vmatpush1.msra.mxu0 %v923
    %930 = vmatprep.subr.mxu0 0.0
    %931 = vmatpush1.msra.mxu0 0.0
    %932 = vmatprep.subr.mxu0 0.0
    %933 = vmatpush1.msra.mxu0 0.0
    %934 = vmatprep.subr.mxu0 0.0
    %935 = vmatpush1.msra.mxu0 0.0
    %936 = vmatprep.subr.mxu0 0.0
    %937 = vmatpush1.msra.mxu0 0.0
    %938 = vmatprep.subr.mxu0 0.0
    %939 = vmatpush1.msra.mxu0 0.0
    %940 = vmatprep.subr.mxu0 0.0
    %941 = vmatpush1.msra.mxu0 0.0
    %942 = vmatprep.subr.mxu0 0.0
    %943 = vmatpush1.msra.mxu0 0.0
    %944 = vmatprep.subr.mxu0 0.0
    %945 = vmatpush1.msra.mxu0 0.0
    %946 = vmatprep.subr.mxu0 0.0
    %947 = vmatpush1.msra.mxu0 0.0
    %948 = vmatprep.subr.mxu0 0.0
    %949 = vmatpush1.msra.mxu0 0.0
    %950 = vmatprep.subr.mxu0 0.0
    %951 = vmatpush1.msra.mxu0 0.0
    %952 = vmatprep.subr.mxu0 0.0
    %953 = vmatpush1.msra.mxu0 0.0
    %954 = vmatprep.subr.mxu0 0.0
    %955 = vmatpush1.msra.mxu0 0.0
    %956 = vmatprep.subr.mxu0 0.0
    %957 = vmatpush1.msra.mxu0 0.0
    %958 = vmatprep.subr.mxu0 0.0
    %959 = vmatpush1.msra.mxu0 0.0
    %960 = vmatprep.subr.mxu0 0.0
    %961 = vmatpush1.msra.mxu0 0.0
    %962 = vmatprep.subr.mxu0 0.0
    %963 = vmatpush1.msra.mxu0 0.0
    %964 = vmatprep.subr.mxu0 0.0
    %965 = vmatpush1.msra.mxu0 0.0
    %966 = vmatprep.subr.mxu0 0.0
    %967 = vmatpush1.msra.mxu0 0.0
    %968 = vmatprep.subr.mxu0 0.0
    %969 = vmatpush1.msra.mxu0 0.0
    %970 = vmatprep.subr.mxu0 0.0
    %971 = vmatpush1.msra.mxu0 0.0
    %972 = vmatprep.subr.mxu0 0.0
    %973 = vmatpush1.msra.mxu0 0.0
    %974 = vmatprep.subr.mxu0 0.0
    %975 = vmatpush1.msra.mxu0 0.0
    %976 = vmatprep.subr.mxu0 0.0
    %977 = vmatpush1.msra.mxu0 0.0
    %978 = vmatprep.subr.mxu0 0.0
    %979 = vmatpush1.msra.mxu0 0.0
    %980 = vmatprep.subr.mxu0 0.0
    %981 = vmatpush1.msra.mxu0 0.0
    %982 = vmatprep.subr.mxu0 0.0
    %983 = vmatpush1.msra.mxu0 0.0
    %984 = vmatprep.subr.mxu0 0.0
    %985 = vmatpush1.msra.mxu0 0.0
    %986 = vmatprep.subr.mxu0 0.0
    %987 = vmatpush1.msra.mxu0 0.0
    %988 = vmatprep.subr.mxu0 0.0
    %989 = vmatpush1.msra.mxu0 0.0
    %990 = vmatprep.subr.mxu0 0.0
    %991 = vmatpush1.msra.mxu0 0.0
    %992 = vmatprep.mubr.f32.mxu0 0.0
    %993 = vmatmul.mubr.f32.gmra.mrb[0].mxu0 %v926
    %v994 = vpop.f32.mrb[0].mxu0
    %v995 = vadd.f32 0.0, %v994
    %v996 = vpop.f32.mrb[0].mxu0
    %997 = vdwg.mxu0
    %998 = vrot.lane.b32.xlu0 %v144, 120
    %v999 = vpop.permute.xlu0 %998
    %1000 = vrot.lane.b32.xlu0 %v144, 88
    %v1001 = vpop.permute.xlu0 %1000
    %v1002 = vsel %vm155, %v999, 0
    %v1004 = vsel %vm155, %v1001, 0
    %1006 = vmatprep.subr.mxu0 0.0
    %1007 = vmatpush1.xpose.msra.mxu0 %v1004
    %1008 = vmatprep.subr.mxu0 0.0
    %1009 = vmatpush1.xpose.msra.mxu0 0.0
    %1010 = vmatprep.subr.mxu0 0.0
    %1011 = vmatpush1.xpose.msra.mxu0 0.0
    %1012 = vmatprep.subr.mxu0 0.0
    %1013 = vmatpush1.xpose.msra.mxu0 0.0
    %1014 = vmatprep.subr.mxu0 0.0
    %1015 = vmatpush1.xpose.msra.mxu0 0.0
    %1016 = vmatprep.subr.mxu0 0.0
    %1017 = vmatpush1.xpose.msra.mxu0 0.0
    %1018 = vmatprep.subr.mxu0 0.0
    %1019 = vmatpush1.xpose.msra.mxu0 0.0
    %1020 = vmatprep.subr.mxu0 0.0
    %1021 = vmatpush1.xpose.msra.mxu0 0.0
    %1022 = vmatprep.subr.mxu0 0.0
    %1023 = vmatpush1.xpose.msra.mxu0 0.0
    %1024 = vmatprep.subr.mxu0 0.0
    %1025 = vmatpush1.xpose.msra.mxu0 0.0
    %1026 = vmatprep.subr.mxu0 0.0
    %1027 = vmatpush1.xpose.msra.mxu0 0.0
    %1028 = vmatprep.subr.mxu0 0.0
    %1029 = vmatpush1.xpose.msra.mxu0 0.0
    %1030 = vmatprep.subr.mxu0 0.0
    %1031 = vmatpush1.xpose.msra.mxu0 0.0
    %1032 = vmatprep.subr.mxu0 0.0
    %1033 = vmatpush1.xpose.msra.mxu0 0.0
    %1034 = vmatprep.subr.mxu0 0.0
    %1035 = vmatpush1.xpose.msra.mxu0 0.0
    %1036 = vmatprep.subr.mxu0 0.0
    %1037 = vmatpush1.xpose.msra.mxu0 0.0
    %1038 = vmatprep.subr.mxu0 0.0
    %1039 = vmatpush1.xpose.msra.mxu0 0.0
    %1040 = vmatprep.subr.mxu0 0.0
    %1041 = vmatpush1.xpose.msra.mxu0 0.0
    %1042 = vmatprep.subr.mxu0 0.0
    %1043 = vmatpush1.xpose.msra.mxu0 0.0
    %1044 = vmatprep.subr.mxu0 0.0
    %1045 = vmatpush1.xpose.msra.mxu0 0.0
    %1046 = vmatprep.subr.mxu0 0.0
    %1047 = vmatpush1.xpose.msra.mxu0 0.0
    %1048 = vmatprep.subr.mxu0 0.0
    %1049 = vmatpush1.xpose.msra.mxu0 0.0
    %1050 = vmatprep.subr.mxu0 0.0
    %1051 = vmatpush1.xpose.msra.mxu0 0.0
    %1052 = vmatprep.subr.mxu0 0.0
    %1053 = vmatpush1.xpose.msra.mxu0 0.0
    %1054 = vmatprep.subr.mxu0 0.0
    %1055 = vmatpush1.xpose.msra.mxu0 0.0
    %1056 = vmatprep.subr.mxu0 0.0
    %1057 = vmatpush1.xpose.msra.mxu0 0.0
    %1058 = vmatprep.subr.mxu0 0.0
    %1059 = vmatpush1.xpose.msra.mxu0 0.0
    %1060 = vmatprep.subr.mxu0 0.0
    %1061 = vmatpush1.xpose.msra.mxu0 0.0
    %1062 = vmatprep.subr.mxu0 0.0
    %1063 = vmatpush1.xpose.msra.mxu0 0.0
    %1064 = vmatprep.subr.mxu0 0.0
    %1065 = vmatpush1.xpose.msra.mxu0 0.0
    %1066 = vmatprep.subr.mxu0 0.0
    %1067 = vmatpush1.xpose.msra.mxu0 0.0
    %1068 = vmatprep.subr.mxu0 0.0
    %1069 = vmatpush1.xpose.msra.mxu0 0.0
    %1070 = vmatprep.mubr.f32.mxu0 0.0
    %1071 = vmatmul.mubr.f32.gmra.mrb[0].mxu0 %v1002
    %v1072 = vpop.f32.mrb[0].mxu0
    %v1073 = vadd.f32 0.0, %v1072
    %v1074 = vpop.f32.mrb[0].mxu0
    %1075 = vdwg.mxu0
    %v1076 = vsel %vm151, %v1073, -1e+30
    %v1077 = vsel %vm155, %v1076, -inf
    %1078 = vmax.xlane.f32.xlu0 %v1077
    %v1079 = vpop.xlane.xlu0 %1078
    %v1080 = vsub.f32 %v1076, %v1079
    %v1081 = vmul.f32 %v1080, 1.442695
    %v1082 = vpow.pop %v1081
    %v1083 = vsel %vm155, %v1082, 0.0
    %1084 = vadd.xlane.f32.xlu0 %v1083
    %v1085 = vpop.xlane.xlu0 %1084
    %v1086 = vrcp.pop %v1085
    %v1087 = vmul.f32 %v1082, %v1086
    %1088 = vrot.lane.b32.xlu0 %v144, 56
    %v1089 = vpop.permute.xlu0 %1088
    %v1092 = vsel %vm155, %v1087, 0
    %1094 = vmatprep.subr.mxu0 0.0
    %1095 = vmatpush1.msra.mxu0 %v1089
    %1096 = vmatprep.subr.mxu0 0.0
    %1097 = vmatpush1.msra.mxu0 0.0
    %1098 = vmatprep.subr.mxu0 0.0
    %1099 = vmatpush1.msra.mxu0 0.0
    %1100 = vmatprep.subr.mxu0 0.0
    %1101 = vmatpush1.msra.mxu0 0.0
    %1102 = vmatprep.subr.mxu0 0.0
    %1103 = vmatpush1.msra.mxu0 0.0
    %1104 = vmatprep.subr.mxu0 0.0
    %1105 = vmatpush1.msra.mxu0 0.0
    %1106 = vmatprep.subr.mxu0 0.0
    %1107 = vmatpush1.msra.mxu0 0.0
    %1108 = vmatprep.subr.mxu0 0.0
    %1109 = vmatpush1.msra.mxu0 0.0
    %1110 = vmatprep.subr.mxu0 0.0
    %1111 = vmatpush1.msra.mxu0 0.0
    %1112 = vmatprep.subr.mxu0 0.0
    %1113 = vmatpush1.msra.mxu0 0.0
    %1114 = vmatprep.subr.mxu0 0.0
    %1115 = vmatpush1.msra.mxu0 0.0
    %1116 = vmatprep.subr.mxu0 0.0
    %1117 = vmatpush1.msra.mxu0 0.0
    %1118 = vmatprep.subr.mxu0 0.0
    %1119 = vmatpush1.msra.mxu0 0.0
    %1120 = vmatprep.subr.mxu0 0.0
    %1121 = vmatpush1.msra.mxu0 0.0
    %1122 = vmatprep.subr.mxu0 0.0
    %1123 = vmatpush1.msra.mxu0 0.0
    %1124 = vmatprep.subr.mxu0 0.0
    %1125 = vmatpush1.msra.mxu0 0.0
    %1126 = vmatprep.subr.mxu0 0.0
    %1127 = vmatpush1.msra.mxu0 0.0
    %1128 = vmatprep.subr.mxu0 0.0
    %1129 = vmatpush1.msra.mxu0 0.0
    %1130 = vmatprep.subr.mxu0 0.0
    %1131 = vmatpush1.msra.mxu0 0.0
    %1132 = vmatprep.subr.mxu0 0.0
    %1133 = vmatpush1.msra.mxu0 0.0
    %1134 = vmatprep.subr.mxu0 0.0
    %1135 = vmatpush1.msra.mxu0 0.0
    %1136 = vmatprep.subr.mxu0 0.0
    %1137 = vmatpush1.msra.mxu0 0.0
    %1138 = vmatprep.subr.mxu0 0.0
    %1139 = vmatpush1.msra.mxu0 0.0
    %1140 = vmatprep.subr.mxu0 0.0
    %1141 = vmatpush1.msra.mxu0 0.0
    %1142 = vmatprep.subr.mxu0 0.0
    %1143 = vmatpush1.msra.mxu0 0.0
    %1144 = vmatprep.subr.mxu0 0.0
    %1145 = vmatpush1.msra.mxu0 0.0
    %1146 = vmatprep.subr.mxu0 0.0
    %1147 = vmatpush1.msra.mxu0 0.0
    %1148 = vmatprep.subr.mxu0 0.0
    %1149 = vmatpush1.msra.mxu0 0.0
    %1150 = vmatprep.subr.mxu0 0.0
    %1151 = vmatpush1.msra.mxu0 0.0
    %1152 = vmatprep.subr.mxu0 0.0
    %1153 = vmatpush1.msra.mxu0 0.0
    %1154 = vmatprep.subr.mxu0 0.0
    %1155 = vmatpush1.msra.mxu0 0.0
    %1156 = vmatprep.subr.mxu0 0.0
    %1157 = vmatpush1.msra.mxu0 0.0
    %1158 = vmatprep.mubr.f32.mxu0 0.0
    %1159 = vmatmul.mubr.f32.gmra.mrb[0].mxu0 %v1092
    %v1160 = vpop.f32.mrb[0].mxu0
    %v1161 = vadd.f32 0.0, %v1160
    %v1162 = vpop.f32.mrb[0].mxu0
    %1163 = vdwg.mxu0
    %1164 = vrot.lane.b32.xlu0 %v144, 112
    %v1165 = vpop.permute.xlu0 %1164
    %1166 = vrot.lane.b32.xlu0 %v144, 80
    %v1167 = vpop.permute.xlu0 %1166
    %v1168 = vsel %vm155, %v1165, 0
    %v1170 = vsel %vm155, %v1167, 0
    %1172 = vmatprep.subr.mxu0 0.0
    %1173 = vmatpush1.xpose.msra.mxu0 %v1170
    %1174 = vmatprep.subr.mxu0 0.0
    %1175 = vmatpush1.xpose.msra.mxu0 0.0
    %1176 = vmatprep.subr.mxu0 0.0
    %1177 = vmatpush1.xpose.msra.mxu0 0.0
    %1178 = vmatprep.subr.mxu0 0.0
    %1179 = vmatpush1.xpose.msra.mxu0 0.0
    %1180 = vmatprep.subr.mxu0 0.0
    %1181 = vmatpush1.xpose.msra.mxu0 0.0
    %1182 = vmatprep.subr.mxu0 0.0
    %1183 = vmatpush1.xpose.msra.mxu0 0.0
    %1184 = vmatprep.subr.mxu0 0.0
    %1185 = vmatpush1.xpose.msra.mxu0 0.0
    %1186 = vmatprep.subr.mxu0 0.0
    %1187 = vmatpush1.xpose.msra.mxu0 0.0
    %1188 = vmatprep.subr.mxu0 0.0
    %1189 = vmatpush1.xpose.msra.mxu0 0.0
    %1190 = vmatprep.subr.mxu0 0.0
    %1191 = vmatpush1.xpose.msra.mxu0 0.0
    %1192 = vmatprep.subr.mxu0 0.0
    %1193 = vmatpush1.xpose.msra.mxu0 0.0
    %1194 = vmatprep.subr.mxu0 0.0
    %1195 = vmatpush1.xpose.msra.mxu0 0.0
    %1196 = vmatprep.subr.mxu0 0.0
    %1197 = vmatpush1.xpose.msra.mxu0 0.0
    %1198 = vmatprep.subr.mxu0 0.0
    %1199 = vmatpush1.xpose.msra.mxu0 0.0
    %1200 = vmatprep.subr.mxu0 0.0
    %1201 = vmatpush1.xpose.msra.mxu0 0.0
    %1202 = vmatprep.subr.mxu0 0.0
    %1203 = vmatpush1.xpose.msra.mxu0 0.0
    %1204 = vmatprep.subr.mxu0 0.0
    %1205 = vmatpush1.xpose.msra.mxu0 0.0
    %1206 = vmatprep.subr.mxu0 0.0
    %1207 = vmatpush1.xpose.msra.mxu0 0.0
    %1208 = vmatprep.subr.mxu0 0.0
    %1209 = vmatpush1.xpose.msra.mxu0 0.0
    %1210 = vmatprep.subr.mxu0 0.0
    %1211 = vmatpush1.xpose.msra.mxu0 0.0
    %1212 = vmatprep.subr.mxu0 0.0
    %1213 = vmatpush1.xpose.msra.mxu0 0.0
    %1214 = vmatprep.subr.mxu0 0.0
    %1215 = vmatpush1.xpose.msra.mxu0 0.0
    %1216 = vmatprep.subr.mxu0 0.0
    %1217 = vmatpush1.xpose.msra.mxu0 0.0
    %1218 = vmatprep.subr.mxu0 0.0
    %1219 = vmatpush1.xpose.msra.mxu0 0.0
    %1220 = vmatprep.subr.mxu0 0.0
    %1221 = vmatpush1.xpose.msra.mxu0 0.0
    %1222 = vmatprep.subr.mxu0 0.0
    %1223 = vmatpush1.xpose.msra.mxu0 0.0
    %1224 = vmatprep.subr.mxu0 0.0
    %1225 = vmatpush1.xpose.msra.mxu0 0.0
    %1226 = vmatprep.subr.mxu0 0.0
    %1227 = vmatpush1.xpose.msra.mxu0 0.0
    %1228 = vmatprep.subr.mxu0 0.0
    %1229 = vmatpush1.xpose.msra.mxu0 0.0
    %1230 = vmatprep.subr.mxu0 0.0
    %1231 = vmatpush1.xpose.msra.mxu0 0.0
    %1232 = vmatprep.subr.mxu0 0.0
    %1233 = vmatpush1.xpose.msra.mxu0 0.0
    %1234 = vmatprep.subr.mxu0 0.0
    %1235 = vmatpush1.xpose.msra.mxu0 0.0
    %1236 = vmatprep.mubr.f32.mxu0 0.0
    %1237 = vmatmul.mubr.f32.gmra.mrb[0].mxu0 %v1168
    %v1238 = vpop.f32.mrb[0].mxu0
    %v1239 = vadd.f32 0.0, %v1238
    %v1240 = vpop.f32.mrb[0].mxu0
    %1241 = vdwg.mxu0
    %v1242 = vsel %vm151, %v1239, -1e+30
    %v1243 = vsel %vm155, %v1242, -inf
    %1244 = vmax.xlane.f32.xlu0 %v1243
    %v1245 = vpop.xlane.xlu0 %1244
    %v1246 = vsub.f32 %v1242, %v1245
    %v1247 = vmul.f32 %v1246, 1.442695
    %v1248 = vpow.pop %v1247
    %v1249 = vsel %vm155, %v1248, 0.0
    %1250 = vadd.xlane.f32.xlu0 %v1249
    %v1251 = vpop.xlane.xlu0 %1250
    %v1252 = vrcp.pop %v1251
    %v1253 = vmul.f32 %v1248, %v1252
    %1254 = vrot.lane.b32.xlu0 %v144, 48
    %v1255 = vpop.permute.xlu0 %1254
    %v1258 = vsel %vm155, %v1253, 0
    %1260 = vmatprep.subr.mxu0 0.0
    %1261 = vmatpush1.msra.mxu0 %v1255
    %1262 = vmatprep.subr.mxu0 0.0
    %1263 = vmatpush1.msra.mxu0 0.0
    %1264 = vmatprep.subr.mxu0 0.0
    %1265 = vmatpush1.msra.mxu0 0.0
    %1266 = vmatprep.subr.mxu0 0.0
    %1267 = vmatpush1.msra.mxu0 0.0
    %1268 = vmatprep.subr.mxu0 0.0
    %1269 = vmatpush1.msra.mxu0 0.0
    %1270 = vmatprep.subr.mxu0 0.0
    %1271 = vmatpush1.msra.mxu0 0.0
    %1272 = vmatprep.subr.mxu0 0.0
    %1273 = vmatpush1.msra.mxu0 0.0
    %1274 = vmatprep.subr.mxu0 0.0
    %1275 = vmatpush1.msra.mxu0 0.0
    %1276 = vmatprep.subr.mxu0 0.0
    %1277 = vmatpush1.msra.mxu0 0.0
    %1278 = vmatprep.subr.mxu0 0.0
    %1279 = vmatpush1.msra.mxu0 0.0
    %1280 = vmatprep.subr.mxu0 0.0
    %1281 = vmatpush1.msra.mxu0 0.0
    %1282 = vmatprep.subr.mxu0 0.0
    %1283 = vmatpush1.msra.mxu0 0.0
    %1284 = vmatprep.subr.mxu0 0.0
    %1285 = vmatpush1.msra.mxu0 0.0
    %1286 = vmatprep.subr.mxu0 0.0
    %1287 = vmatpush1.msra.mxu0 0.0
    %1288 = vmatprep.subr.mxu0 0.0
    %1289 = vmatpush1.msra.mxu0 0.0
    %1290 = vmatprep.subr.mxu0 0.0
    %1291 = vmatpush1.msra.mxu0 0.0
    %1292 = vmatprep.subr.mxu0 0.0
    %1293 = vmatpush1.msra.mxu0 0.0
    %1294 = vmatprep.subr.mxu0 0.0
    %1295 = vmatpush1.msra.mxu0 0.0
    %1296 = vmatprep.subr.mxu0 0.0
    %1297 = vmatpush1.msra.mxu0 0.0
    %1298 = vmatprep.subr.mxu0 0.0
    %1299 = vmatpush1.msra.mxu0 0.0
    %1300 = vmatprep.subr.mxu0 0.0
    %1301 = vmatpush1.msra.mxu0 0.0
    %1302 = vmatprep.subr.mxu0 0.0
    %1303 = vmatpush1.msra.mxu0 0.0
    %1304 = vmatprep.subr.mxu0 0.0
    %1305 = vmatpush1.msra.mxu0 0.0
    %1306 = vmatprep.subr.mxu0 0.0
    %1307 = vmatpush1.msra.mxu0 0.0
    %1308 = vmatprep.subr.mxu0 0.0
    %1309 = vmatpush1.msra.mxu0 0.0
    %1310 = vmatprep.subr.mxu0 0.0
    %1311 = vmatpush1.msra.mxu0 0.0
    %1312 = vmatprep.subr.mxu0 0.0
    %1313 = vmatpush1.msra.mxu0 0.0
    %1314 = vmatprep.subr.mxu0 0.0
    %1315 = vmatpush1.msra.mxu0 0.0
    %1316 = vmatprep.subr.mxu0 0.0
    %1317 = vmatpush1.msra.mxu0 0.0
    %1318 = vmatprep.subr.mxu0 0.0
    %1319 = vmatpush1.msra.mxu0 0.0
    %1320 = vmatprep.subr.mxu0 0.0
    %1321 = vmatpush1.msra.mxu0 0.0
    %1322 = vmatprep.subr.mxu0 0.0
    %1323 = vmatpush1.msra.mxu0 0.0
    %1324 = vmatprep.mubr.f32.mxu0 0.0
    %1325 = vmatmul.mubr.f32.gmra.mrb[0].mxu0 %v1258
    %v1326 = vpop.f32.mrb[0].mxu0
    %v1327 = vadd.f32 0.0, %v1326
    %v1328 = vpop.f32.mrb[0].mxu0
    %1329 = vdwg.mxu0
    %1330 = vrot.lane.b32.xlu0 %v144, 104
    %v1331 = vpop.permute.xlu0 %1330
    %1332 = vrot.lane.b32.xlu0 %v144, 72
    %v1333 = vpop.permute.xlu0 %1332
    %v1334 = vsel %vm155, %v1331, 0
    %v1336 = vsel %vm155, %v1333, 0
    %1338 = vmatprep.subr.mxu0 0.0
    %1339 = vmatpush1.xpose.msra.mxu0 %v1336
    %1340 = vmatprep.subr.mxu0 0.0
    %1341 = vmatpush1.xpose.msra.mxu0 0.0
    %1342 = vmatprep.subr.mxu0 0.0
    %1343 = vmatpush1.xpose.msra.mxu0 0.0
    %1344 = vmatprep.subr.mxu0 0.0
    %1345 = vmatpush1.xpose.msra.mxu0 0.0
    %1346 = vmatprep.subr.mxu0 0.0
    %1347 = vmatpush1.xpose.msra.mxu0 0.0
    %1348 = vmatprep.subr.mxu0 0.0
    %1349 = vmatpush1.xpose.msra.mxu0 0.0
    %1350 = vmatprep.subr.mxu0 0.0
    %1351 = vmatpush1.xpose.msra.mxu0 0.0
    %1352 = vmatprep.subr.mxu0 0.0
    %1353 = vmatpush1.xpose.msra.mxu0 0.0
    %1354 = vmatprep.subr.mxu0 0.0
    %1355 = vmatpush1.xpose.msra.mxu0 0.0
    %1356 = vmatprep.subr.mxu0 0.0
    %1357 = vmatpush1.xpose.msra.mxu0 0.0
    %1358 = vmatprep.subr.mxu0 0.0
    %1359 = vmatpush1.xpose.msra.mxu0 0.0
    %1360 = vmatprep.subr.mxu0 0.0
    %1361 = vmatpush1.xpose.msra.mxu0 0.0
    %1362 = vmatprep.subr.mxu0 0.0
    %1363 = vmatpush1.xpose.msra.mxu0 0.0
    %1364 = vmatprep.subr.mxu0 0.0
    %1365 = vmatpush1.xpose.msra.mxu0 0.0
    %1366 = vmatprep.subr.mxu0 0.0
    %1367 = vmatpush1.xpose.msra.mxu0 0.0
    %1368 = vmatprep.subr.mxu0 0.0
    %1369 = vmatpush1.xpose.msra.mxu0 0.0
    %1370 = vmatprep.subr.mxu0 0.0
    %1371 = vmatpush1.xpose.msra.mxu0 0.0
    %1372 = vmatprep.subr.mxu0 0.0
    %1373 = vmatpush1.xpose.msra.mxu0 0.0
    %1374 = vmatprep.subr.mxu0 0.0
    %1375 = vmatpush1.xpose.msra.mxu0 0.0
    %1376 = vmatprep.subr.mxu0 0.0
    %1377 = vmatpush1.xpose.msra.mxu0 0.0
    %1378 = vmatprep.subr.mxu0 0.0
    %1379 = vmatpush1.xpose.msra.mxu0 0.0
    %1380 = vmatprep.subr.mxu0 0.0
    %1381 = vmatpush1.xpose.msra.mxu0 0.0
    %1382 = vmatprep.subr.mxu0 0.0
    %1383 = vmatpush1.xpose.msra.mxu0 0.0
    %1384 = vmatprep.subr.mxu0 0.0
    %1385 = vmatpush1.xpose.msra.mxu0 0.0
    %1386 = vmatprep.subr.mxu0 0.0
    %1387 = vmatpush1.xpose.msra.mxu0 0.0
    %1388 = vmatprep.subr.mxu0 0.0
    %1389 = vmatpush1.xpose.msra.mxu0 0.0
    %1390 = vmatprep.subr.mxu0 0.0
    %1391 = vmatpush1.xpose.msra.mxu0 0.0
    %1392 = vmatprep.subr.mxu0 0.0
    %1393 = vmatpush1.xpose.msra.mxu0 0.0
    %1394 = vmatprep.subr.mxu0 0.0
    %1395 = vmatpush1.xpose.msra.mxu0 0.0
    %1396 = vmatprep.subr.mxu0 0.0
    %1397 = vmatpush1.xpose.msra.mxu0 0.0
    %1398 = vmatprep.subr.mxu0 0.0
    %1399 = vmatpush1.xpose.msra.mxu0 0.0
    %1400 = vmatprep.subr.mxu0 0.0
    %1401 = vmatpush1.xpose.msra.mxu0 0.0
    %1402 = vmatprep.mubr.f32.mxu0 0.0
    %1403 = vmatmul.mubr.f32.gmra.mrb[0].mxu0 %v1334
    %v1404 = vpop.f32.mrb[0].mxu0
    %v1405 = vadd.f32 0.0, %v1404
    %v1406 = vpop.f32.mrb[0].mxu0
    %1407 = vdwg.mxu0
    %v1408 = vsel %vm151, %v1405, -1e+30
    %v1409 = vsel %vm155, %v1408, -inf
    %1410 = vmax.xlane.f32.xlu0 %v1409
    %v1411 = vpop.xlane.xlu0 %1410
    %v1412 = vsub.f32 %v1408, %v1411
    %v1413 = vmul.f32 %v1412, 1.442695
    %v1414 = vpow.pop %v1413
    %v1415 = vsel %vm155, %v1414, 0.0
    %1416 = vadd.xlane.f32.xlu0 %v1415
    %v1417 = vpop.xlane.xlu0 %1416
    %v1418 = vrcp.pop %v1417
    %v1419 = vmul.f32 %v1414, %v1418
    %1420 = vrot.lane.b32.xlu0 %v144, 40
    %v1421 = vpop.permute.xlu0 %1420
    %v1424 = vsel %vm155, %v1419, 0
    %1426 = vmatprep.subr.mxu0 0.0
    %1427 = vmatpush1.msra.mxu0 %v1421
    %1428 = vmatprep.subr.mxu0 0.0
    %1429 = vmatpush1.msra.mxu0 0.0
    %1430 = vmatprep.subr.mxu0 0.0
    %1431 = vmatpush1.msra.mxu0 0.0
    %1432 = vmatprep.subr.mxu0 0.0
    %1433 = vmatpush1.msra.mxu0 0.0
    %1434 = vmatprep.subr.mxu0 0.0
    %1435 = vmatpush1.msra.mxu0 0.0
    %1436 = vmatprep.subr.mxu0 0.0
    %1437 = vmatpush1.msra.mxu0 0.0
    %1438 = vmatprep.subr.mxu0 0.0
    %1439 = vmatpush1.msra.mxu0 0.0
    %1440 = vmatprep.subr.mxu0 0.0
    %1441 = vmatpush1.msra.mxu0 0.0
    %1442 = vmatprep.subr.mxu0 0.0
    %1443 = vmatpush1.msra.mxu0 0.0
    %1444 = vmatprep.subr.mxu0 0.0
    %1445 = vmatpush1.msra.mxu0 0.0
    %1446 = vmatprep.subr.mxu0 0.0
    %1447 = vmatpush1.msra.mxu0 0.0
    %1448 = vmatprep.subr.mxu0 0.0
    %1449 = vmatpush1.msra.mxu0 0.0
    %1450 = vmatprep.subr.mxu0 0.0
    %1451 = vmatpush1.msra.mxu0 0.0
    %1452 = vmatprep.subr.mxu0 0.0
    %1453 = vmatpush1.msra.mxu0 0.0
    %1454 = vmatprep.subr.mxu0 0.0
    %1455 = vmatpush1.msra.mxu0 0.0
    %1456 = vmatprep.subr.mxu0 0.0
    %1457 = vmatpush1.msra.mxu0 0.0
    %1458 = vmatprep.subr.mxu0 0.0
    %1459 = vmatpush1.msra.mxu0 0.0
    %1460 = vmatprep.subr.mxu0 0.0
    %1461 = vmatpush1.msra.mxu0 0.0
    %1462 = vmatprep.subr.mxu0 0.0
    %1463 = vmatpush1.msra.mxu0 0.0
    %1464 = vmatprep.subr.mxu0 0.0
    %1465 = vmatpush1.msra.mxu0 0.0
    %1466 = vmatprep.subr.mxu0 0.0
    %1467 = vmatpush1.msra.mxu0 0.0
    %1468 = vmatprep.subr.mxu0 0.0
    %1469 = vmatpush1.msra.mxu0 0.0
    %1470 = vmatprep.subr.mxu0 0.0
    %1471 = vmatpush1.msra.mxu0 0.0
    %1472 = vmatprep.subr.mxu0 0.0
    %1473 = vmatpush1.msra.mxu0 0.0
    %1474 = vmatprep.subr.mxu0 0.0
    %1475 = vmatpush1.msra.mxu0 0.0
    %1476 = vmatprep.subr.mxu0 0.0
    %1477 = vmatpush1.msra.mxu0 0.0
    %1478 = vmatprep.subr.mxu0 0.0
    %1479 = vmatpush1.msra.mxu0 0.0
    %1480 = vmatprep.subr.mxu0 0.0
    %1481 = vmatpush1.msra.mxu0 0.0
    %1482 = vmatprep.subr.mxu0 0.0
    %1483 = vmatpush1.msra.mxu0 0.0
    %1484 = vmatprep.subr.mxu0 0.0
    %1485 = vmatpush1.msra.mxu0 0.0
    %1486 = vmatprep.subr.mxu0 0.0
    %1487 = vmatpush1.msra.mxu0 0.0
    %1488 = vmatprep.subr.mxu0 0.0
    %1489 = vmatpush1.msra.mxu0 0.0
    %1490 = vmatprep.mubr.f32.mxu0 0.0
    %1491 = vmatmul.mubr.f32.gmra.mrb[0].mxu0 %v1424
    %v1492 = vpop.f32.mrb[0].mxu0
    %v1493 = vadd.f32 0.0, %v1492
    %v1494 = vpop.f32.mrb[0].mxu0
    %1495 = vdwg.mxu0
    %1497 = vrot.lane.b32.xlu0 %v1161, 8
    %v1498 = vpop.permute.xlu0 %1497
    %1501 = vrot.lane.b32.xlu0 %v1327, 16
    %v1502 = vpop.permute.xlu0 %1501
    %1505 = vrot.lane.b32.xlu0 %v1493, 24
    %v1506 = vpop.permute.xlu0 %1505
    %v1508 = vsel %vm155, %v995, %v1498
    %v1509 = vsel %vm829, %v1508, %v1502
    %v1510 = vsel %vm831, %v1509, %v1506
    %v1511 = vld [vmem:[#allocation7] sm:$0xff]
    %v1512 = vld [vmem:[#allocation7 + $0x8] sm:$0xff]
    %v1513 = vld [vmem:[#allocation7 + $0x10] sm:$0xff]
    %v1514 = vld [vmem:[#allocation7 + $0x18] sm:$0xff]
    %v1515 = vld [vmem:[%s3] sm:$0x1]
    %v1517 = vlaneseq
    %v1518 = vshrl.u32 %v1517, 7
    %v1519 = vsub.s32 0, %v1518
    %v1520 = vrot.slane %v1515, %v1519
    %v1523 = vsel %vm65, %v832, 0
    %v1526 = vsel %vm65, %v1510, 0
    %1528 = vmatprep.subr.mxu0 0.0
    %1529 = vmatpush1.msra.mxu0 %v1511
    %1530 = vmatprep.subr.mxu0 0.0
    %1531 = vmatpush1.msra.mxu0 %v1512
    %1532 = vmatprep.subr.mxu0 0.0
    %1533 = vmatpush1.msra.mxu0 %v1513
    %1534 = vmatprep.subr.mxu0 0.0
    %1535 = vmatpush1.msra.mxu0 %v1514
    %1536 = vmatprep.subr.mxu0 0.0
    %1537 = vmatpush1.msra.mxu0 0.0
    %1538 = vmatprep.subr.mxu0 0.0
    %1539 = vmatpush1.msra.mxu0 0.0
    %1540 = vmatprep.subr.mxu0 0.0
    %1541 = vmatpush1.msra.mxu0 0.0
    %1542 = vmatprep.subr.mxu0 0.0
    %1543 = vmatpush1.msra.mxu0 0.0
    %1544 = vmatprep.subr.mxu0 0.0
    %1545 = vmatpush1.msra.mxu0 0.0
    %1546 = vmatprep.subr.mxu0 0.0
    %1547 = vmatpush1.msra.mxu0 0.0
    %1548 = vmatprep.subr.mxu0 0.0
    %1549 = vmatpush1.msra.mxu0 0.0
    %1550 = vmatprep.subr.mxu0 0.0
    %1551 = vmatpush1.msra.mxu0 0.0
    %1552 = vmatprep.subr.mxu0 0.0
    %1553 = vmatpush1.msra.mxu0 0.0
    %1554 = vmatprep.subr.mxu0 0.0
    %1555 = vmatpush1.msra.mxu0 0.0
    %1556 = vmatprep.subr.mxu0 0.0
    %1557 = vmatpush1.msra.mxu0 0.0
    %1558 = vmatprep.subr.mxu0 0.0
    %1559 = vmatpush1.msra.mxu0 0.0
    %1560 = vmatprep.subr.mxu0 0.0
    %1561 = vmatpush1.msra.mxu0 0.0
    %1562 = vmatprep.subr.mxu0 0.0
    %1563 = vmatpush1.msra.mxu0 0.0
    %1564 = vmatprep.subr.mxu0 0.0
    %1565 = vmatpush1.msra.mxu0 0.0
    %1566 = vmatprep.subr.mxu0 0.0
    %1567 = vmatpush1.msra.mxu0 0.0
    %1568 = vmatprep.subr.mxu0 0.0
    %1569 = vmatpush1.msra.mxu0 0.0
    %1570 = vmatprep.subr.mxu0 0.0
    %1571 = vmatpush1.msra.mxu0 0.0
    %1572 = vmatprep.subr.mxu0 0.0
    %1573 = vmatpush1.msra.mxu0 0.0
    %1574 = vmatprep.subr.mxu0 0.0
    %1575 = vmatpush1.msra.mxu0 0.0
    %1576 = vmatprep.subr.mxu0 0.0
    %1577 = vmatpush1.msra.mxu0 0.0
    %1578 = vmatprep.subr.mxu0 0.0
    %1579 = vmatpush1.msra.mxu0 0.0
    %1580 = vmatprep.subr.mxu0 0.0
    %1581 = vmatpush1.msra.mxu0 0.0
    %1582 = vmatprep.subr.mxu0 0.0
    %1583 = vmatpush1.msra.mxu0 0.0
    %1584 = vmatprep.subr.mxu0 0.0
    %1585 = vmatpush1.msra.mxu0 0.0
    %1586 = vmatprep.subr.mxu0 0.0
    %1587 = vmatpush1.msra.mxu0 0.0
    %1588 = vmatprep.subr.mxu0 0.0
    %1589 = vmatpush1.msra.mxu0 0.0
    %1590 = vmatprep.subr.mxu0 0.0
    %1591 = vmatpush1.msra.mxu0 0.0
    %1592 = vmatprep.mubr.f32.mxu0 0.0
    %1593 = vmatmul.mubr.f32.gmra.mrb[0].mxu0 %v1523
    %v1594 = vpop.f32.mrb[0].mxu0
    %v1595 = vadd.f32 %v1520, %v1594
    %v1596 = vpop.f32.mrb[0].mxu0
    %1597 = vmatprep.mubr.f32.mxu0 0.0
    %1598 = vmatmul.mubr.f32.gmra.mrb[0].mxu0 %v1526
    %v1599 = vpop.f32.mrb[0].mxu0
    %v1600 = vadd.f32 %v1520, %v1599
    %v1601 = vpop.f32.mrb[0].mxu0
    %1602 = vdwg.mxu0
    %1603 = vst.msk [vmem:[#allocation8] sm:$0xff] %vm65, %v1595
    %1604 = vst.msk [vmem:[#allocation8 + $0x8] sm:$0xff] %vm65, %v1600
    // Predicated region
    $region30: #{multi_head_attention.1} parent=1 // pred_check
      _
    $region31: #{multi_head_attention.1} parent=1 // pred_check_branch
      %1606 = sbr.rel (0) target = $region33
    $region32: #{multi_head_attention.1} parent=1 // pred_region
      %s1608 = ssub.s32 256, 256
      %1609 = vsyncadd [#allocation4], %s1608
      %s1610 = sshll.u32 [#allocation8], 4
      %s1611 = int_to_ptr.vmem [resolvable:$true] %s1610
      %1616 = dma.vmem_to_hbm [thread:$0]  %s1611, 256, %s4, [#allocation4], 128, 128, 8
    $region33: #{multi_head_attention.1} parent=1 // pred_fallthru
      _
    // Predicated region
    $region34: #{multi_head_attention.1} parent=1 // pred_check
      _
    $region35: #{multi_head_attention.1} parent=1 // pred_check_branch
      %1618 = sbr.rel (0) target = $region37
    $region36: #{multi_head_attention.1} parent=1 // pred_region
      %1619 = dma.done [#allocation4], 256
    $region37: #{multi_head_attention.1} parent=1 // pred_fallthru
      _
    %1620 = vsyncpa [#allocation3], 1
    %1621 = vsyncpa [#allocation6], 1
    %1622 = vsyncpa [#allocation4], 1

</llo_original>
